<compile_context>
chip_gen: v7x
topology: tpu7x:2x2x1
jax: 0.10.0
libtpu: 0.0.40
codegen_flags: <defaults>
</compile_context>

<pallas_src>
import functools
import math

import jax
import jax.numpy as jnp
from jax.experimental import pallas as pl
from jax.experimental.pallas import tpu as pltpu


def channel_attention_kernel(x_ref, w9c_ref, bconv_ref, wfc_ref, bfc_ref,
                             out_ref, *, width, scale):
    nb, c, hw = out_ref.shape          # batch block, channels, H*W
    w = width

    # Hoisted column masks (built once, reused by all taps / batches).
    col = jax.lax.broadcasted_iota(jnp.int32, (1, hw), 1) % w
    not_left = jnp.broadcast_to(col > 0, (c, hw))        # j-1 stays in row
    not_right = jnp.broadcast_to(col < (w - 1), (c, hw))  # j+1 stays in row

    # --- Conv2d(C, C, k=3, pad=1) as ONE wide-K MXU matmul ------------------
    # The wrapper pre-padded the flattened slab by (W+1) zeros per side, so
    # every tap is a static lane window.  Stack the 9 masked taps along K
    # (sublanes) and the batch along N (lanes): (9C, nb*HW).
    per_batch = []
    for b in range(nb):
        taps = []
        for dy in (-1, 0, 1):
            for dx in (-1, 0, 1):
                start = (dy + 1) * w + (dx + 1)           # static lane offset
                tap = x_ref[b, :, start:start + hw]        # (C, HW)
                if dx == -1:
                    tap = jnp.where(not_left, tap, 0.0)
                elif dx == 1:
                    tap = jnp.where(not_right, tap, 0.0)
                taps.append(tap)
        per_batch.append(jnp.concatenate(taps, axis=0))    # (9C, HW)
    stacked = (per_batch[0] if nb == 1
               else jnp.concatenate(per_batch, axis=1))    # (9C, nb*HW)

    # (C, 9C) @ (9C, nb*HW): K=9C fills the MXU far better than 9 K=C pushes.
    y_all = jnp.dot(w9c_ref[...], stacked,
                    preferred_element_type=jnp.float32) + bconv_ref[...]

    # --- fc_o before softmax (reassociated epilogue) -------------------------
    # (att @ y) @ W^T == att @ (y @ W^T); computing yfc here lets the MXU run
    # the big HW x HW contraction while the EUP/XLU do the tiny softmax.
    # Batch stacked along M -> one (nb*C, HW) @ (HW, HW)^T contraction.
    if nb == 1:
        y_m = y_all                                         # (C, HW)
    else:
        y_m = jnp.concatenate(
            [y_all[:, b * hw:(b + 1) * hw] for b in range(nb)], axis=0)
    yfc = jax.lax.dot_general(
        y_m, wfc_ref[...], dimension_numbers=(((1,), (1,)), ((), ())),
        preferred_element_type=jnp.float32)                 # (nb*C, HW)

    # --- per-batch channel attention (h=1, d_k=HW) ---------------------------
    for b in range(nb):
        y_b = y_m[b * c:(b + 1) * c, :]                     # (C, HW)
        # y @ y^T without materializing a transpose (contract last dims).
        att = jax.lax.dot_general(
            y_b, y_b, dimension_numbers=(((1,), (1,)), ((), ())),
            preferred_element_type=jnp.float32) * scale     # (C, C)
        att = att - jnp.max(att, axis=-1, keepdims=True)
        e = jnp.exp(att)
        # Exact reciprocal: approx=True (~12-bit) would eat the 1e-5 atol.
        att = e * pl.reciprocal(jnp.sum(e, axis=-1, keepdims=True), approx=False)
        # TODO(synk): nn.Dropout(p=0.1) on the attention map omitted (eval mode).
        out = jnp.dot(att, yfc[b * c:(b + 1) * c, :],
                      preferred_element_type=jnp.float32) + bfc_ref[...]
        out_ref[b] = out.astype(out_ref.dtype)


def _default_batch_block(bs):
    """Single-TC chips (v5e/v6e): fold the whole batch into one grid step.
    Dual-TC v7x: two batch blocks so both TensorCores get work."""
    try:
        kind = jax.devices()[0].device_kind.lower()
    except Exception:
        kind = ""
    if "v7" in kind and bs % 2 == 0:
        return bs // 2
    return bs


def channel_attention_module(x, conv_w, conv_b, fc_w, fc_b, *, batch_block=None):
    """x: (bs, C, H, W) float32 NCHW.  Returns (bs, C, H*W)."""
    bs, c, h, w = x.shape
    hw = h * w

    if batch_block is None:
        batch_block = _default_batch_block(bs)
    assert bs % batch_block == 0
    nsteps = bs // batch_block

    # Flatten spatial and pad (W+1) zeros each side so every 3x3 tap is a
    # static lane window of the flattened slab (1x HBM traffic, no im2col).
    x_pad = jnp.pad(x.reshape(bs, c, hw), ((0, 0), (0, 0), (w + 1, w + 1)))
    padded = hw + 2 * (w + 1)

    # conv_w (C_out, C_in, 3, 3) -> (C_out, 9*C_in), K index = (ky*3+kx)*C + ci
    # to match the in-kernel tap stacking order.
    w9c = jnp.transpose(conv_w, (0, 2, 3, 1)).reshape(c, 9 * c)
    bconv = conv_b.reshape(c, 1)
    bfc = fc_b.reshape(1, hw)

    kernel = functools.partial(channel_attention_kernel,
                               width=w, scale=1.0 / math.sqrt(float(hw)))

    # NOTE: at DANet-realistic HW (e.g. 64x64) the resident (HW,HW) fc_w tile
    # would exceed VMEM (esp. v7x 64 MiB); it would then need a reduction grid
    # axis over fc_w column chunks or manual HBM double-buffering.  At HW=256
    # everything fits in ~1-2 MiB.
    return pl.pallas_call(
        kernel,
        out_shape=jax.ShapeDtypeStruct((bs, c, hw), x.dtype),
        grid_spec=pltpu.PrefetchScalarGridSpec(
            num_scalar_prefetch=0,
            grid=(nsteps,),
            in_specs=[
                pl.BlockSpec((batch_block, c, padded), lambda i: (i, 0, 0)),
                pl.BlockSpec((c, 9 * c), lambda i: (0, 0)),
                pl.BlockSpec((c, 1), lambda i: (0, 0)),
                pl.BlockSpec((hw, hw), lambda i: (0, 0)),
                pl.BlockSpec((1, hw), lambda i: (0, 0)),
            ],
            out_specs=pl.BlockSpec((batch_block, c, hw), lambda i: (i, 0, 0)),
        ),
        compiler_params=pltpu.CompilerParams(
            dimension_semantics=(pltpu.PARALLEL,),
            vmem_limit_bytes=8 * 1024 * 1024),
    )(x_pad, w9c, bconv, fc_w, bfc)


def reference(x, conv_w, conv_b, fc_w, fc_b):
    """Pure-JAX reference of the PyTorch forward (eval mode)."""
    bs, c, h, w = x.shape
    hi = jax.lax.Precision.HIGHEST
    y = jax.lax.conv_general_dilated(
        x, conv_w, window_strides=(1, 1), padding="SAME",
        dimension_numbers=("NCHW", "OIHW", "NCHW"),
        precision=hi) + conv_b[None, :, None, None]
    y = y.reshape(bs, c, h * w)
    att = jnp.einsum("bcd,bed->bce", y, y, precision=hi) / math.sqrt(float(h * w))
    att = jax.nn.softmax(att, axis=-1)
    out = jnp.einsum("bce,bed->bcd", att, y, precision=hi)
    return jnp.einsum("bcd,od->bco", out, fc_w, precision=hi) + fc_b


if __name__ == "__main__":
    # HW = 256 -> lane-dense (multiple of 128) tiles; C multiple of 8.
    bs, c, H, W = 2, 16, 16, 16
    hw = H * W

    key = jax.random.PRNGKey(0)
    kx_, kc_, kf_ = jax.random.split(key, 3)

    # Deterministic parameter init mirroring the module's init_weights():
    #   conv: kaiming_normal_(mode='fan_out') -> std = sqrt(2 / (C_out*k*k)), bias 0
    #   fc_o: normal(std=0.001), bias 0
    fan_out = c * 3 * 3
    conv_w = jax.random.normal(kc_, (c, c, 3, 3), jnp.float32) * math.sqrt(2.0 / fan_out)
    conv_b = jnp.zeros((c,), jnp.float32)
    fc_w = jax.random.normal(kf_, (hw, hw), jnp.float32) * 0.001
    fc_b = jnp.zeros((hw,), jnp.float32)

    x = jax.random.normal(kx_, (bs, c, H, W), jnp.float32)

    out = jax.block_until_ready(channel_attention_module(x, conv_w, conv_b, fc_w, fc_b))
    ref = jax.block_until_ready(reference(x, conv_w, conv_b, fc_w, fc_b))

    assert out.shape == (bs, c, hw), out.shape
    max_err = float(jnp.max(jnp.abs(out - ref)))
    assert jnp.allclose(out, ref, rtol=1e-4, atol=1e-5), max_err

    print("KERNEL_OK")
</pallas_src>

<mosaic_0001>
module attributes {stable_mosaic.version = 11 : i64} {
  func.func @channel_attention_kernel(%arg0: i32, %arg1: memref<2x16x290xf32, #tpu.memory_space<vmem>>, %arg2: memref<16x144xf32, #tpu.memory_space<vmem>>, %arg3: memref<16x1xf32, #tpu.memory_space<vmem>>, %arg4: memref<256x256xf32, #tpu.memory_space<vmem>>, %arg5: memref<1x256xf32, #tpu.memory_space<vmem>>, %arg6: memref<2x16x256xf32, #tpu.memory_space<vmem>>) attributes {dimension_semantics = [#tpu.dimension_semantics<parallel>], iteration_bounds = array<i64: 1>, scalar_prefetch = 0 : i64, scratch_operands = 0 : i64, tpu.core_type = #tpu.core_type<tc>, window_params = [{transform_indices = @transform_0, window_bounds = array<i64: 2, 16, 290>}, {pipeline_mode = #tpu.pipeline_mode<synchronous>, transform_indices = @transform_1, window_bounds = array<i64: 16, 144>}, {pipeline_mode = #tpu.pipeline_mode<synchronous>, transform_indices = @transform_2, window_bounds = array<i64: 16, 1>}, {pipeline_mode = #tpu.pipeline_mode<synchronous>, transform_indices = @transform_3, window_bounds = array<i64: 256, 256>}, {pipeline_mode = #tpu.pipeline_mode<synchronous>, transform_indices = @transform_4, window_bounds = array<i64: 1, 256>}, {transform_indices = @transform_5, window_bounds = array<i64: 2, 16, 256>}]} {
    %0 = tpu.iota {dimensions = array<i32: 1>} : vector<1x256xi32>
    %c16_i32 = arith.constant 16 : i32
    %c0_i32 = arith.constant 0 : i32
    %1 = arith.cmpi eq, %c16_i32, %c0_i32 : i32
    %c1_i32 = arith.constant 1 : i32
    %2 = arith.select %1, %c1_i32, %c16_i32 : i32
    %3 = vector.broadcast %2 : i32 to vector<1x256xi32>
    %4 = arith.remsi %0, %3 : vector<1x256xi32>
    %c0_i32_0 = arith.constant 0 : i32
    %5 = vector.broadcast %c0_i32_0 : i32 to vector<1x256xi32>
    %6 = arith.cmpi ne, %4, %5 : vector<1x256xi32>
    %c0_i32_1 = arith.constant 0 : i32
    %7 = vector.broadcast %c0_i32_1 : i32 to vector<1x256xi32>
    %8 = arith.cmpi slt, %4, %7 : vector<1x256xi32>
    %c0_i32_2 = arith.constant 0 : i32
    %9 = arith.cmpi slt, %2, %c0_i32_2 : i32
    %10 = vector.broadcast %9 : i1 to vector<1x256xi1>
    %11 = vector.broadcast %10 : vector<1x256xi1> to vector<1x256xi1>
    %12 = arith.xori %8, %11 : vector<1x256xi1>
    %13 = arith.andi %12, %6 : vector<1x256xi1>
    %14 = vector.broadcast %2 : i32 to vector<1x256xi32>
    %15 = arith.addi %4, %14 : vector<1x256xi32>
    %16 = arith.select %13, %15, %4 : vector<1x256xi1>, vector<1x256xi32>
    %c0_i32_3 = arith.constant 0 : i32
    %17 = vector.broadcast %c0_i32_3 : i32 to vector<1x256xi32>
    %18 = arith.cmpi sgt, %16, %17 : vector<1x256xi32>
    %19 = vector.shape_cast %18 : vector<1x256xi1> to vector<1x256xi1>
    %20 = vector.broadcast %19 : vector<1x256xi1> to vector<16x256xi1>
    %c15_i32 = arith.constant 15 : i32
    %21 = vector.broadcast %c15_i32 : i32 to vector<1x256xi32>
    %22 = arith.cmpi slt, %16, %21 : vector<1x256xi32>
    %23 = vector.shape_cast %22 : vector<1x256xi1> to vector<1x256xi1>
    %24 = vector.broadcast %23 : vector<1x256xi1> to vector<16x256xi1>
    %c0 = arith.constant 0 : index
    %c0_4 = arith.constant 0 : index
    %c0_5 = arith.constant 0 : index
    %25 = vector.load %arg1[%c0, %c0_4, %c0_5] : memref<2x16x290xf32, #tpu.memory_space<vmem>>, vector<1x16x256xf32>
    %26 = vector.shape_cast %25 : vector<1x16x256xf32> to vector<16x256xf32>
    %cst = arith.constant 0.000000e+00 : f32
    %27 = vector.broadcast %cst : f32 to vector<16x256xf32>
    %28 = arith.select %20, %26, %27 : vector<16x256xi1>, vector<16x256xf32>
    %c0_6 = arith.constant 0 : index
    %c0_7 = arith.constant 0 : index
    %c1 = arith.constant 1 : index
    %29 = vector.load %arg1[%c0_6, %c0_7, %c1] : memref<2x16x290xf32, #tpu.memory_space<vmem>>, vector<1x16x256xf32>
    %30 = vector.shape_cast %29 : vector<1x16x256xf32> to vector<16x256xf32>
    %c0_8 = arith.constant 0 : index
    %c0_9 = arith.constant 0 : index
    %c2 = arith.constant 2 : index
    %31 = vector.load %arg1[%c0_8, %c0_9, %c2] : memref<2x16x290xf32, #tpu.memory_space<vmem>>, vector<1x16x256xf32>
    %32 = vector.shape_cast %31 : vector<1x16x256xf32> to vector<16x256xf32>
    %cst_10 = arith.constant 0.000000e+00 : f32
    %33 = vector.broadcast %cst_10 : f32 to vector<16x256xf32>
    %34 = arith.select %24, %32, %33 : vector<16x256xi1>, vector<16x256xf32>
    %c0_11 = arith.constant 0 : index
    %c0_12 = arith.constant 0 : index
    %c16 = arith.constant 16 : index
    %35 = vector.load %arg1[%c0_11, %c0_12, %c16] : memref<2x16x290xf32, #tpu.memory_space<vmem>>, vector<1x16x256xf32>
    %36 = vector.shape_cast %35 : vector<1x16x256xf32> to vector<16x256xf32>
    %cst_13 = arith.constant 0.000000e+00 : f32
    %37 = vector.broadcast %cst_13 : f32 to vector<16x256xf32>
    %38 = arith.select %20, %36, %37 : vector<16x256xi1>, vector<16x256xf32>
    %c0_14 = arith.constant 0 : index
    %c0_15 = arith.constant 0 : index
    %c17 = arith.constant 17 : index
    %39 = vector.load %arg1[%c0_14, %c0_15, %c17] : memref<2x16x290xf32, #tpu.memory_space<vmem>>, vector<1x16x256xf32>
    %40 = vector.shape_cast %39 : vector<1x16x256xf32> to vector<16x256xf32>
    %c0_16 = arith.constant 0 : index
    %c0_17 = arith.constant 0 : index
    %c18 = arith.constant 18 : index
    %41 = vector.load %arg1[%c0_16, %c0_17, %c18] : memref<2x16x290xf32, #tpu.memory_space<vmem>>, vector<1x16x256xf32>
    %42 = vector.shape_cast %41 : vector<1x16x256xf32> to vector<16x256xf32>
    %cst_18 = arith.constant 0.000000e+00 : f32
    %43 = vector.broadcast %cst_18 : f32 to vector<16x256xf32>
    %44 = arith.select %24, %42, %43 : vector<16x256xi1>, vector<16x256xf32>
    %c0_19 = arith.constant 0 : index
    %c0_20 = arith.constant 0 : index
    %c32 = arith.constant 32 : index
    %45 = vector.load %arg1[%c0_19, %c0_20, %c32] : memref<2x16x290xf32, #tpu.memory_space<vmem>>, vector<1x16x256xf32>
    %46 = vector.shape_cast %45 : vector<1x16x256xf32> to vector<16x256xf32>
    %cst_21 = arith.constant 0.000000e+00 : f32
    %47 = vector.broadcast %cst_21 : f32 to vector<16x256xf32>
    %48 = arith.select %20, %46, %47 : vector<16x256xi1>, vector<16x256xf32>
    %c0_22 = arith.constant 0 : index
    %c0_23 = arith.constant 0 : index
    %c33 = arith.constant 33 : index
    %49 = vector.load %arg1[%c0_22, %c0_23, %c33] : memref<2x16x290xf32, #tpu.memory_space<vmem>>, vector<1x16x256xf32>
    %50 = vector.shape_cast %49 : vector<1x16x256xf32> to vector<16x256xf32>
    %c0_24 = arith.constant 0 : index
    %c0_25 = arith.constant 0 : index
    %c34 = arith.constant 34 : index
    %51 = vector.load %arg1[%c0_24, %c0_25, %c34] : memref<2x16x290xf32, #tpu.memory_space<vmem>>, vector<1x16x256xf32>
    %52 = vector.shape_cast %51 : vector<1x16x256xf32> to vector<16x256xf32>
    %cst_26 = arith.constant 0.000000e+00 : f32
    %53 = vector.broadcast %cst_26 : f32 to vector<16x256xf32>
    %54 = arith.select %24, %52, %53 : vector<16x256xi1>, vector<16x256xf32>
    %55 = tpu.concatenate %28, %30, %34, %38, %40, %44, %48, %50, %54 in 0 : vector<16x256xf32>, vector<16x256xf32>, vector<16x256xf32>, vector<16x256xf32>, vector<16x256xf32>, vector<16x256xf32>, vector<16x256xf32>, vector<16x256xf32>, vector<16x256xf32> -> vector<144x256xf32>
    %c1_27 = arith.constant 1 : index
    %c0_28 = arith.constant 0 : index
    %c0_29 = arith.constant 0 : index
    %56 = vector.load %arg1[%c1_27, %c0_28, %c0_29] : memref<2x16x290xf32, #tpu.memory_space<vmem>>, vector<1x16x256xf32>
    %57 = vector.shape_cast %56 : vector<1x16x256xf32> to vector<16x256xf32>
    %cst_30 = arith.constant 0.000000e+00 : f32
    %58 = vector.broadcast %cst_30 : f32 to vector<16x256xf32>
    %59 = arith.select %20, %57, %58 : vector<16x256xi1>, vector<16x256xf32>
    %c1_31 = arith.constant 1 : index
    %c0_32 = arith.constant 0 : index
    %c1_33 = arith.constant 1 : index
    %60 = vector.load %arg1[%c1_31, %c0_32, %c1_33] : memref<2x16x290xf32, #tpu.memory_space<vmem>>, vector<1x16x256xf32>
    %61 = vector.shape_cast %60 : vector<1x16x256xf32> to vector<16x256xf32>
    %c1_34 = arith.constant 1 : index
    %c0_35 = arith.constant 0 : index
    %c2_36 = arith.constant 2 : index
    %62 = vector.load %arg1[%c1_34, %c0_35, %c2_36] : memref<2x16x290xf32, #tpu.memory_space<vmem>>, vector<1x16x256xf32>
    %63 = vector.shape_cast %62 : vector<1x16x256xf32> to vector<16x256xf32>
    %cst_37 = arith.constant 0.000000e+00 : f32
    %64 = vector.broadcast %cst_37 : f32 to vector<16x256xf32>
    %65 = arith.select %24, %63, %64 : vector<16x256xi1>, vector<16x256xf32>
    %c1_38 = arith.constant 1 : index
    %c0_39 = arith.constant 0 : index
    %c16_40 = arith.constant 16 : index
    %66 = vector.load %arg1[%c1_38, %c0_39, %c16_40] : memref<2x16x290xf32, #tpu.memory_space<vmem>>, vector<1x16x256xf32>
    %67 = vector.shape_cast %66 : vector<1x16x256xf32> to vector<16x256xf32>
    %cst_41 = arith.constant 0.000000e+00 : f32
    %68 = vector.broadcast %cst_41 : f32 to vector<16x256xf32>
    %69 = arith.select %20, %67, %68 : vector<16x256xi1>, vector<16x256xf32>
    %c1_42 = arith.constant 1 : index
    %c0_43 = arith.constant 0 : index
    %c17_44 = arith.constant 17 : index
    %70 = vector.load %arg1[%c1_42, %c0_43, %c17_44] : memref<2x16x290xf32, #tpu.memory_space<vmem>>, vector<1x16x256xf32>
    %71 = vector.shape_cast %70 : vector<1x16x256xf32> to vector<16x256xf32>
    %c1_45 = arith.constant 1 : index
    %c0_46 = arith.constant 0 : index
    %c18_47 = arith.constant 18 : index
    %72 = vector.load %arg1[%c1_45, %c0_46, %c18_47] : memref<2x16x290xf32, #tpu.memory_space<vmem>>, vector<1x16x256xf32>
    %73 = vector.shape_cast %72 : vector<1x16x256xf32> to vector<16x256xf32>
    %cst_48 = arith.constant 0.000000e+00 : f32
    %74 = vector.broadcast %cst_48 : f32 to vector<16x256xf32>
    %75 = arith.select %24, %73, %74 : vector<16x256xi1>, vector<16x256xf32>
    %c1_49 = arith.constant 1 : index
    %c0_50 = arith.constant 0 : index
    %c32_51 = arith.constant 32 : index
    %76 = vector.load %arg1[%c1_49, %c0_50, %c32_51] : memref<2x16x290xf32, #tpu.memory_space<vmem>>, vector<1x16x256xf32>
    %77 = vector.shape_cast %76 : vector<1x16x256xf32> to vector<16x256xf32>
    %cst_52 = arith.constant 0.000000e+00 : f32
    %78 = vector.broadcast %cst_52 : f32 to vector<16x256xf32>
    %79 = arith.select %20, %77, %78 : vector<16x256xi1>, vector<16x256xf32>
    %c1_53 = arith.constant 1 : index
    %c0_54 = arith.constant 0 : index
    %c33_55 = arith.constant 33 : index
    %80 = vector.load %arg1[%c1_53, %c0_54, %c33_55] : memref<2x16x290xf32, #tpu.memory_space<vmem>>, vector<1x16x256xf32>
    %81 = vector.shape_cast %80 : vector<1x16x256xf32> to vector<16x256xf32>
    %c1_56 = arith.constant 1 : index
    %c0_57 = arith.constant 0 : index
    %c34_58 = arith.constant 34 : index
    %82 = vector.load %arg1[%c1_56, %c0_57, %c34_58] : memref<2x16x290xf32, #tpu.memory_space<vmem>>, vector<1x16x256xf32>
    %83 = vector.shape_cast %82 : vector<1x16x256xf32> to vector<16x256xf32>
    %cst_59 = arith.constant 0.000000e+00 : f32
    %84 = vector.broadcast %cst_59 : f32 to vector<16x256xf32>
    %85 = arith.select %24, %83, %84 : vector<16x256xi1>, vector<16x256xf32>
    %86 = tpu.concatenate %59, %61, %65, %69, %71, %75, %79, %81, %85 in 0 : vector<16x256xf32>, vector<16x256xf32>, vector<16x256xf32>, vector<16x256xf32>, vector<16x256xf32>, vector<16x256xf32>, vector<16x256xf32>, vector<16x256xf32>, vector<16x256xf32> -> vector<144x256xf32>
    %87 = tpu.concatenate %55, %86 in 1 : vector<144x256xf32>, vector<144x256xf32> -> vector<144x512xf32>
    %c0_60 = arith.constant 0 : index
    %c0_61 = arith.constant 0 : index
    %88 = vector.load %arg2[%c0_60, %c0_61] : memref<16x144xf32, #tpu.memory_space<vmem>>, vector<16x144xf32>
    %cst_62 = arith.constant dense<0.000000e+00> : vector<16x512xf32>
    %89 = tpu.matmul %88, %87, %cst_62 {dimension_numbers = #tpu.dot_dimension_numbers<[1], [0], [0], [1], [0, 0, 1, 1], [], []>} : vector<16x144xf32>, vector<144x512xf32>, vector<16x512xf32> -> vector<16x512xf32>
    %c0_63 = arith.constant 0 : index
    %c0_64 = arith.constant 0 : index
    %90 = vector.load %arg3[%c0_63, %c0_64] : memref<16x1xf32, #tpu.memory_space<vmem>>, vector<16x1xf32>
    %91 = vector.broadcast %90 : vector<16x1xf32> to vector<16x512xf32>
    %92 = arith.addf %89, %91 : vector<16x512xf32>
    %93 = vector.extract_strided_slice %92 {offsets = [0, 0], sizes = [16, 256], strides = [1, 1]} : vector<16x512xf32> to vector<16x256xf32>
    %94 = vector.extract_strided_slice %92 {offsets = [0, 256], sizes = [16, 256], strides = [1, 1]} : vector<16x512xf32> to vector<16x256xf32>
    %95 = tpu.concatenate %93, %94 in 0 : vector<16x256xf32>, vector<16x256xf32> -> vector<32x256xf32>
    %c0_65 = arith.constant 0 : index
    %c0_66 = arith.constant 0 : index
    %96 = vector.load %arg4[%c0_65, %c0_66] : memref<256x256xf32, #tpu.memory_space<vmem>>, vector<256x256xf32>
    %cst_67 = arith.constant dense<0.000000e+00> : vector<32x256xf32>
    %97 = tpu.matmul %95, %96, %cst_67 {dimension_numbers = #tpu.dot_dimension_numbers<[1], [1], [0], [0], [0, 0, 1, 0], [], []>} : vector<32x256xf32>, vector<256x256xf32>, vector<32x256xf32> -> vector<32x256xf32>
    %98 = vector.extract_strided_slice %95 {offsets = [0, 0], sizes = [16, 256], strides = [1, 1]} : vector<32x256xf32> to vector<16x256xf32>
    %cst_68 = arith.constant dense<0.000000e+00> : vector<16x16xf32>
    %99 = tpu.matmul %98, %98, %cst_68 {dimension_numbers = #tpu.dot_dimension_numbers<[1], [1], [0], [0], [0, 0, 1, 0], [], []>} : vector<16x256xf32>, vector<16x256xf32>, vector<16x16xf32> -> vector<16x16xf32>
    %cst_69 = arith.constant 6.250000e-02 : f32
    %100 = vector.broadcast %cst_69 : f32 to vector<16x16xf32>
    %101 = arith.mulf %99, %100 : vector<16x16xf32>
    %cst_70 = arith.constant dense<0xFF800000> : vector<16xf32>
    %102 = vector.multi_reduction <maximumf>, %101, %cst_70 [1] : vector<16x16xf32> to vector<16xf32>
    %103 = vector.shape_cast %102 : vector<16xf32> to vector<16x1xf32>
    %104 = vector.broadcast %103 : vector<16x1xf32> to vector<16x16xf32>
    %105 = arith.subf %101, %104 : vector<16x16xf32>
    %106 = math.exp %105 : vector<16x16xf32>
    %cst_71 = arith.constant dense<0.000000e+00> : vector<16xf32>
    %107 = vector.multi_reduction <add>, %106, %cst_71 [1] : vector<16x16xf32> to vector<16xf32>
    %108 = vector.shape_cast %107 : vector<16xf32> to vector<16x1xf32>
    %109 = tpu.reciprocal %108 : vector<16x1xf32> -> vector<16x1xf32>
    %110 = vector.broadcast %109 : vector<16x1xf32> to vector<16x16xf32>
    %111 = arith.mulf %106, %110 : vector<16x16xf32>
    %112 = vector.extract_strided_slice %97 {offsets = [0, 0], sizes = [16, 256], strides = [1, 1]} : vector<32x256xf32> to vector<16x256xf32>
    %cst_72 = arith.constant dense<0.000000e+00> : vector<16x256xf32>
    %113 = tpu.matmul %111, %112, %cst_72 {dimension_numbers = #tpu.dot_dimension_numbers<[1], [0], [0], [1], [0, 0, 1, 1], [], []>} : vector<16x16xf32>, vector<16x256xf32>, vector<16x256xf32> -> vector<16x256xf32>
    %c0_73 = arith.constant 0 : index
    %c0_74 = arith.constant 0 : index
    %114 = vector.load %arg5[%c0_73, %c0_74] : memref<1x256xf32, #tpu.memory_space<vmem>>, vector<1x256xf32>
    %115 = vector.broadcast %114 : vector<1x256xf32> to vector<16x256xf32>
    %116 = arith.addf %113, %115 : vector<16x256xf32>
    %c0_75 = arith.constant 0 : index
    %c0_76 = arith.constant 0 : index
    %c0_77 = arith.constant 0 : index
    %117 = vector.load %arg6[%c0_75, %c0_76, %c0_77] : memref<2x16x256xf32, #tpu.memory_space<vmem>>, vector<1x16x256xf32>
    %118 = vector.shape_cast %117 : vector<1x16x256xf32> to vector<16x256xf32>
    %119 = vector.shape_cast %116 : vector<16x256xf32> to vector<1x16x256xf32>
    tpu.vector_store %arg6[%c0_75, %c0_76, %c0_77], %119 {strides = array<i32>} : memref<2x16x256xf32, #tpu.memory_space<vmem>>, vector<1x16x256xf32>,
    %120 = vector.extract_strided_slice %95 {offsets = [16, 0], sizes = [16, 256], strides = [1, 1]} : vector<32x256xf32> to vector<16x256xf32>
    %cst_78 = arith.constant dense<0.000000e+00> : vector<16x16xf32>
    %121 = tpu.matmul %120, %120, %cst_78 {dimension_numbers = #tpu.dot_dimension_numbers<[1], [1], [0], [0], [0, 0, 1, 0], [], []>} : vector<16x256xf32>, vector<16x256xf32>, vector<16x16xf32> -> vector<16x16xf32>
    %cst_79 = arith.constant 6.250000e-02 : f32
    %122 = vector.broadcast %cst_79 : f32 to vector<16x16xf32>
    %123 = arith.mulf %121, %122 : vector<16x16xf32>
    %cst_80 = arith.constant dense<0xFF800000> : vector<16xf32>
    %124 = vector.multi_reduction <maximumf>, %123, %cst_80 [1] : vector<16x16xf32> to vector<16xf32>
    %125 = vector.shape_cast %124 : vector<16xf32> to vector<16x1xf32>
    %126 = vector.broadcast %125 : vector<16x1xf32> to vector<16x16xf32>
    %127 = arith.subf %123, %126 : vector<16x16xf32>
    %128 = math.exp %127 : vector<16x16xf32>
    %cst_81 = arith.constant dense<0.000000e+00> : vector<16xf32>
    %129 = vector.multi_reduction <add>, %128, %cst_81 [1] : vector<16x16xf32> to vector<16xf32>
    %130 = vector.shape_cast %129 : vector<16xf32> to vector<16x1xf32>
    %131 = tpu.reciprocal %130 : vector<16x1xf32> -> vector<16x1xf32>
    %132 = vector.broadcast %131 : vector<16x1xf32> to vector<16x16xf32>
    %133 = arith.mulf %128, %132 : vector<16x16xf32>
    %134 = vector.extract_strided_slice %97 {offsets = [16, 0], sizes = [16, 256], strides = [1, 1]} : vector<32x256xf32> to vector<16x256xf32>
    %cst_82 = arith.constant dense<0.000000e+00> : vector<16x256xf32>
    %135 = tpu.matmul %133, %134, %cst_82 {dimension_numbers = #tpu.dot_dimension_numbers<[1], [0], [0], [1], [0, 0, 1, 1], [], []>} : vector<16x16xf32>, vector<16x256xf32>, vector<16x256xf32> -> vector<16x256xf32>
    %c0_83 = arith.constant 0 : index
    %c0_84 = arith.constant 0 : index
    %136 = vector.load %arg5[%c0_83, %c0_84] : memref<1x256xf32, #tpu.memory_space<vmem>>, vector<1x256xf32>
    %137 = vector.broadcast %136 : vector<1x256xf32> to vector<16x256xf32>
    %138 = arith.addf %135, %137 : vector<16x256xf32>
    %c1_85 = arith.constant 1 : index
    %c0_86 = arith.constant 0 : index
    %c0_87 = arith.constant 0 : index
    %139 = vector.load %arg6[%c1_85, %c0_86, %c0_87] : memref<2x16x256xf32, #tpu.memory_space<vmem>>, vector<1x16x256xf32>
    %140 = vector.shape_cast %139 : vector<1x16x256xf32> to vector<16x256xf32>
    %141 = vector.shape_cast %138 : vector<16x256xf32> to vector<1x16x256xf32>
    tpu.vector_store %arg6[%c1_85, %c0_86, %c0_87], %141 {strides = array<i32>} : memref<2x16x256xf32, #tpu.memory_space<vmem>>, vector<1x16x256xf32>,
    return
  }
  func.func @transform_0(%arg0: i32) -> (i32, i32, i32) {
    %c0_i32 = arith.constant 0 : i32
    %c0_i32_0 = arith.constant 0 : i32
    %c0_i32_1 = arith.constant 0 : i32
    return %arg0, %c0_i32, %c0_i32_0 : i32, i32, i32
  }
  func.func @transform_1(%arg0: i32) -> (i32, i32) {
    %c0_i32 = arith.constant 0 : i32
    %c0_i32_0 = arith.constant 0 : i32
    %c0_i32_1 = arith.constant 0 : i32
    return %c0_i32, %c0_i32_0 : i32, i32
  }
  func.func @transform_2(%arg0: i32) -> (i32, i32) {
    %c0_i32 = arith.constant 0 : i32
    %c0_i32_0 = arith.constant 0 : i32
    %c0_i32_1 = arith.constant 0 : i32
    return %c0_i32, %c0_i32_0 : i32, i32
  }
  func.func @transform_3(%arg0: i32) -> (i32, i32) {
    %c0_i32 = arith.constant 0 : i32
    %c0_i32_0 = arith.constant 0 : i32
    %c0_i32_1 = arith.constant 0 : i32
    return %c0_i32, %c0_i32_0 : i32, i32
  }
  func.func @transform_4(%arg0: i32) -> (i32, i32) {
    %c0_i32 = arith.constant 0 : i32
    %c0_i32_0 = arith.constant 0 : i32
    %c0_i32_1 = arith.constant 0 : i32
    return %c0_i32, %c0_i32_0 : i32, i32
  }
  func.func @transform_5(%arg0: i32) -> (i32, i32, i32) {
    %c0_i32 = arith.constant 0 : i32
    %c0_i32_0 = arith.constant 0 : i32
    %c0_i32_1 = arith.constant 0 : i32
    return %arg0, %c0_i32, %c0_i32_0 : i32, i32, i32
  }
}

</mosaic_0001>

<llo_original>
// kernel: tpu_custom_call.1
$region0: #{tpu_custom_call.1}
  #allocation0 [shape = 'u32[]', space=smem, size = 0x4, offset = 0x4, fixed_abs, tag = 'smem constant byte address 0x4 - core index']
  #allocation1 [shape = 'u32[144,128]{1,0:T(1,128)}', space=vmem, size = 0x12000, scoped, tag = 'internal scratch']
  %s0 = inlined_call_operand.hbm [shape: f32[2,16,290], index: 0, kind: input, shape index: {}]
  %s1 = inlined_call_operand.hbm [shape: f32[16,144], index: 1, kind: input, shape index: {}]
  %s2 = inlined_call_operand.vmem [shape: f32[16,1], index: 2, kind: input, shape index: {}]
  %s3 = inlined_call_operand.hbm [shape: f32[256,256], index: 3, kind: input, shape index: {}]
  %s4 = inlined_call_operand.vmem [shape: f32[1,256], index: 4, kind: input, shape index: {}]
  %s5 = inlined_call_operand.hbm [shape: f32[2,16,256], index: 5, kind: output, shape index: {}]
  %s6 = sld [smem:[#allocation0]]
  $region42: #{tpu_custom_call.1} parent=0
    _
  %s8 = ssub.s32 1, %s6
  %s9 = scalar_select 0, %s8, %s6
  $region1: #{tpu_custom_call.1} parent=0
    #allocation2 [shape = 'u8[49152]{0}', space=vmem, size = 0xc000, scoped, tag = 'input window, operand 0, single buffered']
    #allocation3 [shape = 's32[1]{0}', space=sflag, size = 0x4, scoped, tag = 'scoped memory for tpu_custom_call.1']
    #allocation4 [shape = 's32[1]{0}', space=sflag, size = 0x4, scoped, tag = 'scoped memory for tpu_custom_call.1']
    #allocation5 [shape = 'u8[16384]{0}', space=vmem, size = 0x4000, scoped, tag = 'input window, operand 1, single buffered']
    #allocation6 [shape = 's32[1]{0}', space=sflag, size = 0x4, scoped, tag = 'scoped memory for tpu_custom_call.1']
    #allocation7 [shape = 'u8[262144]{0}', space=vmem, size = 0x40000, scoped, tag = 'input window, operand 3, single buffered']
    #allocation8 [shape = 'u8[32768]{0}', space=vmem, size = 0x8000, scoped, tag = 'output window, operand 0, single buffered']
    %10 = vsyncpa [#allocation3], 0
    %11 = vsyncpa [#allocation6], 0
    %12 = vsyncpa [#allocation4], 0
    // Predicated region
    $region2: #{tpu_custom_call.1} parent=1 // pred_check
      _
    $region3: #{tpu_custom_call.1} parent=1 // pred_check_branch
      %14 = sbr.rel (0) target = $region5
    $region4: #{tpu_custom_call.1} parent=1 // pred_region
      %s16 = ssub.s32 1536, 1536
      %17 = vsyncadd [#allocation3], %s16
      %s18 = sshll.u32 [#allocation2], 4
      %s19 = int_to_ptr.vmem [resolvable:$true] %s18
      %24 = dma.hbm_to_vmem [thread:$0]  %s0, 1536, %s19, [#allocation3], 384, 384, 24
    $region5: #{tpu_custom_call.1} parent=1 // pred_fallthru
      _
    // Predicated region
    $region6: #{tpu_custom_call.1} parent=1 // pred_check
      _
    $region7: #{tpu_custom_call.1} parent=1 // pred_check_branch
      %26 = sbr.rel (0) target = $region9
    $region8: #{tpu_custom_call.1} parent=1 // pred_region
      %s28 = ssub.s32 512, 512
      %29 = vsyncadd [#allocation6], %s28
      %s30 = sshll.u32 [#allocation5], 4
      %s31 = int_to_ptr.vmem [resolvable:$true] %s30
      %36 = dma.hbm_to_vmem [thread:$0]  %s1, 512, %s31, [#allocation6], 256, 256, 16
    $region9: #{tpu_custom_call.1} parent=1 // pred_fallthru
      _
    // Predicated region
    $region10: #{tpu_custom_call.1} parent=1 // pred_check
      _
    $region11: #{tpu_custom_call.1} parent=1 // pred_check_branch
      %38 = sbr.rel (0) target = $region13
    $region12: #{tpu_custom_call.1} parent=1 // pred_region
      _
    $region13: #{tpu_custom_call.1} parent=1 // pred_fallthru
      _
    // Predicated region
    $region14: #{tpu_custom_call.1} parent=1 // pred_check
      _
    $region15: #{tpu_custom_call.1} parent=1 // pred_check_branch
      %40 = sbr.rel (0) target = $region17
    $region16: #{tpu_custom_call.1} parent=1 // pred_region
      %s42 = ssub.s32 8192, 8192
      %43 = vsyncadd [#allocation6], %s42
      %s44 = sshll.u32 [#allocation7], 4
      %s45 = int_to_ptr.vmem [resolvable:$true] %s44
      %50 = dma.hbm_to_vmem [thread:$0]  %s3, 8192, %s45, [#allocation6], 256, 256, 16
    $region17: #{tpu_custom_call.1} parent=1 // pred_fallthru
      _
    // Predicated region
    $region18: #{tpu_custom_call.1} parent=1 // pred_check
      _
    $region19: #{tpu_custom_call.1} parent=1 // pred_check_branch
      %52 = sbr.rel (0) target = $region21
    $region20: #{tpu_custom_call.1} parent=1 // pred_region
      _
    $region21: #{tpu_custom_call.1} parent=1 // pred_fallthru
      _
    // Predicated region
    $region22: #{tpu_custom_call.1} parent=1 // pred_check
      _
    $region23: #{tpu_custom_call.1} parent=1 // pred_check_branch
      %54 = sbr.rel (0) target = $region25
    $region24: #{tpu_custom_call.1} parent=1 // pred_region
      %55 = dma.done [#allocation3], 1536
    $region25: #{tpu_custom_call.1} parent=1 // pred_fallthru
      _
    // Predicated region
    $region26: #{tpu_custom_call.1} parent=1 // pred_check
      _
    $region27: #{tpu_custom_call.1} parent=1 // pred_check_branch
      %57 = sbr.rel (0) target = $region29
    $region28: #{tpu_custom_call.1} parent=1 // pred_region
      %58 = dma.done [#allocation6], 512
    $region29: #{tpu_custom_call.1} parent=1 // pred_fallthru
      _
    // Predicated region
    $region30: #{tpu_custom_call.1} parent=1 // pred_check
      _
    $region31: #{tpu_custom_call.1} parent=1 // pred_check_branch
      %60 = sbr.rel (0) target = $region33
    $region32: #{tpu_custom_call.1} parent=1 // pred_region
      %61 = dma.done [#allocation6], 8192
    $region33: #{tpu_custom_call.1} parent=1 // pred_fallthru
      _
    %v62 = vlaneseq
    %v63 = vand.u32 %v62, 127
    %v64 = vadd.s32 %v63, 128
    %vm65 = vcmp.lt.s32.totalorder %v63, 0
    %v66 = vsub.s32 0, %v63
    %v67 = vsel %vm65, %v66, %v63
    %v68 = vshrl.u32 %v67, 4
    %v69 = vand.u32 %v67, 15
    %v70 = vsub.s32 0, %v69
    %v71 = vsel %vm65, %v70, %v69
    %vm72 = vcmp.lt.s32.totalorder %v64, 0
    %v73 = vsub.s32 0, %v64
    %v74 = vsel %vm72, %v73, %v64
    %v75 = vshrl.u32 %v74, 4
    %v76 = vand.u32 %v74, 15
    %v77 = vsub.s32 0, %v76
    %v78 = vsel %vm72, %v77, %v76
    %vm79 = vcmp.ne.s32.totalorder %v71, 0
    %vm80 = vcmp.ne.s32.totalorder %v78, 0
    %vm81 = vcmp.lt.s32.totalorder %v71, 0
    %vm82 = vcmp.lt.s32.totalorder %v78, 0
    %vm83 = vmand %vm81, %vm79
    %vm84 = vmand %vm82, %vm80
    %v85 = vadd.s32 %v71, 16
    %v86 = vadd.s32 %v78, 16
    %v87 = vsel %vm83, %v85, %v71
    %v88 = vsel %vm84, %v86, %v78
    %vm89 = vcmp.gt.s32.totalorder %v87, 0
    %vm90 = vcmp.gt.s32.totalorder %v88, 0
    %v91 = vsel %vm89, 1, 0
    %v92 = vsel %vm90, 1, 0
    %vm93 = vcmp.eq.s32.totalorder %v91, 1
    %vm94 = vcmp.eq.s32.totalorder %v92, 1
    %vm95 = vcmp.lt.s32.totalorder %v87, 15
    %vm96 = vcmp.lt.s32.totalorder %v88, 15
    %v97 = vsel %vm95, 1, 0
    %v98 = vsel %vm96, 1, 0
    %vm99 = vcmp.eq.s32.totalorder %v97, 1
    %vm100 = vcmp.eq.s32.totalorder %v98, 1
    %v101 = vld [vmem:[#allocation2] sm:$0xff]
    %v102 = vld [vmem:[#allocation2 + $0x8] sm:$0xff]
    %v103 = vld [vmem:[#allocation2 + $0x18] sm:$0xff]
    %v104 = vld [vmem:[#allocation2 + $0x20] sm:$0xff]
    %v105 = vsel %vm93, %v101, 0.0
    %v106 = vsel %vm94, %v102, 0.0
    %v107 = vsel %vm93, %v103, 0.0
    %v108 = vsel %vm94, %v104, 0.0
    %v109 = vld [vmem:[#allocation2 + $0x10] sm:$0xff]
    %v110 = vld [vmem:[#allocation2 + $0x28] sm:$0xff]
    %117 = vrot.lane.b32.xlu0 %v101, 126
    %v118 = vpop.permute.xlu0 %117
    %119 = vrot.lane.b32.xlu0 %v102, 126
    %v120 = vpop.permute.xlu0 %119
    %121 = vrot.lane.b32.xlu0 %v109, 126
    %v122 = vpop.permute.xlu0 %121
    %123 = vrot.lane.b32.xlu0 %v103, 126
    %v124 = vpop.permute.xlu0 %123
    %125 = vrot.lane.b32.xlu0 %v104, 126
    %v126 = vpop.permute.xlu0 %125
    %127 = vrot.lane.b32.xlu0 %v110, 126
    %v128 = vpop.permute.xlu0 %127
    %vm129 = vcmask 1031168
    %v130 = vsel %vm129, %v118, %v120
    %v131 = vsel %vm129, %v120, %v122
    %v132 = vsel %vm129, %v124, %v126
    %v133 = vsel %vm129, %v126, %v128
    %v138 = vsel %vm99, %v130, 0.0
    %v139 = vsel %vm100, %v131, 0.0
    %v140 = vsel %vm99, %v132, 0.0
    %v141 = vsel %vm100, %v133, 0.0
    %142 = vrot.lane.b32.xlu0 %v101, 112
    %v143 = vpop.permute.xlu0 %142
    %144 = vrot.lane.b32.xlu0 %v102, 112
    %v145 = vpop.permute.xlu0 %144
    %146 = vrot.lane.b32.xlu0 %v109, 112
    %v147 = vpop.permute.xlu0 %146
    %148 = vrot.lane.b32.xlu0 %v103, 112
    %v149 = vpop.permute.xlu0 %148
    %150 = vrot.lane.b32.xlu0 %v104, 112
    %v151 = vpop.permute.xlu0 %150
    %152 = vrot.lane.b32.xlu0 %v110, 112
    %v153 = vpop.permute.xlu0 %152
    %vm154 = vcmask 916480
    %v155 = vsel %vm154, %v143, %v145
    %v156 = vsel %vm154, %v145, %v147
    %v157 = vsel %vm154, %v149, %v151
    %v158 = vsel %vm154, %v151, %v153
    %v163 = vsel %vm93, %v155, 0.0
    %v164 = vsel %vm94, %v156, 0.0
    %v165 = vsel %vm93, %v157, 0.0
    %v166 = vsel %vm94, %v158, 0.0
    %167 = vrot.lane.b32.xlu0 %v101, 110
    %v168 = vpop.permute.xlu0 %167
    %169 = vrot.lane.b32.xlu0 %v102, 110
    %v170 = vpop.permute.xlu0 %169
    %171 = vrot.lane.b32.xlu0 %v109, 110
    %v172 = vpop.permute.xlu0 %171
    %173 = vrot.lane.b32.xlu0 %v103, 110
    %v174 = vpop.permute.xlu0 %173
    %175 = vrot.lane.b32.xlu0 %v104, 110
    %v176 = vpop.permute.xlu0 %175
    %177 = vrot.lane.b32.xlu0 %v110, 110
    %v178 = vpop.permute.xlu0 %177
    %vm179 = vcmask 900096
    %v180 = vsel %vm179, %v168, %v170
    %v181 = vsel %vm179, %v170, %v172
    %v182 = vsel %vm179, %v174, %v176
    %v183 = vsel %vm179, %v176, %v178
    %v188 = vsel %vm99, %v180, 0.0
    %v189 = vsel %vm100, %v181, 0.0
    %v190 = vsel %vm99, %v182, 0.0
    %v191 = vsel %vm100, %v183, 0.0
    %192 = vrot.lane.b32.xlu0 %v101, 96
    %v193 = vpop.permute.xlu0 %192
    %194 = vrot.lane.b32.xlu0 %v102, 96
    %v195 = vpop.permute.xlu0 %194
    %196 = vrot.lane.b32.xlu0 %v109, 96
    %v197 = vpop.permute.xlu0 %196
    %198 = vrot.lane.b32.xlu0 %v103, 96
    %v199 = vpop.permute.xlu0 %198
    %200 = vrot.lane.b32.xlu0 %v104, 96
    %v201 = vpop.permute.xlu0 %200
    %202 = vrot.lane.b32.xlu0 %v110, 96
    %v203 = vpop.permute.xlu0 %202
    %vm204 = vcmask 785408
    %v205 = vsel %vm204, %v193, %v195
    %v206 = vsel %vm204, %v195, %v197
    %v207 = vsel %vm204, %v199, %v201
    %v208 = vsel %vm204, %v201, %v203
    %v213 = vsel %vm93, %v205, 0.0
    %v214 = vsel %vm94, %v206, 0.0
    %v215 = vsel %vm93, %v207, 0.0
    %v216 = vsel %vm94, %v208, 0.0
    %217 = vrot.lane.b32.xlu0 %v101, 94
    %v218 = vpop.permute.xlu0 %217
    %219 = vrot.lane.b32.xlu0 %v102, 94
    %v220 = vpop.permute.xlu0 %219
    %221 = vrot.lane.b32.xlu0 %v109, 94
    %v222 = vpop.permute.xlu0 %221
    %223 = vrot.lane.b32.xlu0 %v103, 94
    %v224 = vpop.permute.xlu0 %223
    %225 = vrot.lane.b32.xlu0 %v104, 94
    %v226 = vpop.permute.xlu0 %225
    %227 = vrot.lane.b32.xlu0 %v110, 94
    %v228 = vpop.permute.xlu0 %227
    %vm229 = vcmask 769024
    %v230 = vsel %vm229, %v218, %v220
    %v231 = vsel %vm229, %v220, %v222
    %v232 = vsel %vm229, %v224, %v226
    %v233 = vsel %vm229, %v226, %v228
    %v238 = vsel %vm99, %v230, 0.0
    %v239 = vsel %vm100, %v231, 0.0
    %v240 = vsel %vm99, %v232, 0.0
    %v241 = vsel %vm100, %v233, 0.0
    %242 = vrot.lane.b32.xlu0 %v101, 127
    %v243 = vpop.permute.xlu0 %242
    %244 = vrot.lane.b32.xlu0 %v102, 127
    %v245 = vpop.permute.xlu0 %244
    %246 = vrot.lane.b32.xlu0 %v109, 127
    %v247 = vpop.permute.xlu0 %246
    %248 = vrot.lane.b32.xlu0 %v103, 127
    %v249 = vpop.permute.xlu0 %248
    %250 = vrot.lane.b32.xlu0 %v104, 127
    %v251 = vpop.permute.xlu0 %250
    %252 = vrot.lane.b32.xlu0 %v110, 127
    %v253 = vpop.permute.xlu0 %252
    %vm254 = vcmask 1039360
    %v255 = vsel %vm254, %v243, %v245
    %v256 = vsel %vm254, %v245, %v247
    %v257 = vsel %vm254, %v249, %v251
    %v258 = vsel %vm254, %v251, %v253
    %263 = vrot.lane.b32.xlu0 %v101, 111
    %v264 = vpop.permute.xlu0 %263
    %265 = vrot.lane.b32.xlu0 %v102, 111
    %v266 = vpop.permute.xlu0 %265
    %267 = vrot.lane.b32.xlu0 %v109, 111
    %v268 = vpop.permute.xlu0 %267
    %269 = vrot.lane.b32.xlu0 %v103, 111
    %v270 = vpop.permute.xlu0 %269
    %271 = vrot.lane.b32.xlu0 %v104, 111
    %v272 = vpop.permute.xlu0 %271
    %273 = vrot.lane.b32.xlu0 %v110, 111
    %v274 = vpop.permute.xlu0 %273
    %vm275 = vcmask 908288
    %v276 = vsel %vm275, %v264, %v266
    %v277 = vsel %vm275, %v266, %v268
    %v278 = vsel %vm275, %v270, %v272
    %v279 = vsel %vm275, %v272, %v274
    %284 = vrot.lane.b32.xlu0 %v101, 95
    %v285 = vpop.permute.xlu0 %284
    %286 = vrot.lane.b32.xlu0 %v102, 95
    %v287 = vpop.permute.xlu0 %286
    %288 = vrot.lane.b32.xlu0 %v109, 95
    %v289 = vpop.permute.xlu0 %288
    %290 = vrot.lane.b32.xlu0 %v103, 95
    %v291 = vpop.permute.xlu0 %290
    %292 = vrot.lane.b32.xlu0 %v104, 95
    %v293 = vpop.permute.xlu0 %292
    %294 = vrot.lane.b32.xlu0 %v110, 95
    %v295 = vpop.permute.xlu0 %294
    %vm296 = vcmask 777216
    %v297 = vsel %vm296, %v285, %v287
    %v298 = vsel %vm296, %v287, %v289
    %v299 = vsel %vm296, %v291, %v293
    %v300 = vsel %vm296, %v293, %v295
    %s305 = scalar_lea.vmem [#allocation2], 48
    %v306 = vld [vmem:[%s305] sm:$0xff]
    %v307 = vld [vmem:[%s305 + $0x8] sm:$0xff]
    %v308 = vld [vmem:[%s305 + $0x18] sm:$0xff]
    %v309 = vld [vmem:[%s305 + $0x20] sm:$0xff]
    %v310 = vsel %vm93, %v306, 0.0
    %v311 = vsel %vm94, %v307, 0.0
    %v312 = vsel %vm93, %v308, 0.0
    %v313 = vsel %vm94, %v309, 0.0
    %v314 = vld [vmem:[%s305 + $0x10] sm:$0xff]
    %v315 = vld [vmem:[%s305 + $0x28] sm:$0xff]
    %322 = vrot.lane.b32.xlu0 %v306, 126
    %v323 = vpop.permute.xlu0 %322
    %324 = vrot.lane.b32.xlu0 %v307, 126
    %v325 = vpop.permute.xlu0 %324
    %326 = vrot.lane.b32.xlu0 %v314, 126
    %v327 = vpop.permute.xlu0 %326
    %328 = vrot.lane.b32.xlu0 %v308, 126
    %v329 = vpop.permute.xlu0 %328
    %330 = vrot.lane.b32.xlu0 %v309, 126
    %v331 = vpop.permute.xlu0 %330
    %332 = vrot.lane.b32.xlu0 %v315, 126
    %v333 = vpop.permute.xlu0 %332
    %v334 = vsel %vm129, %v323, %v325
    %v335 = vsel %vm129, %v325, %v327
    %v336 = vsel %vm129, %v329, %v331
    %v337 = vsel %vm129, %v331, %v333
    %v342 = vsel %vm99, %v334, 0.0
    %v343 = vsel %vm100, %v335, 0.0
    %v344 = vsel %vm99, %v336, 0.0
    %v345 = vsel %vm100, %v337, 0.0
    %346 = vrot.lane.b32.xlu0 %v306, 112
    %v347 = vpop.permute.xlu0 %346
    %348 = vrot.lane.b32.xlu0 %v307, 112
    %v349 = vpop.permute.xlu0 %348
    %350 = vrot.lane.b32.xlu0 %v314, 112
    %v351 = vpop.permute.xlu0 %350
    %352 = vrot.lane.b32.xlu0 %v308, 112
    %v353 = vpop.permute.xlu0 %352
    %354 = vrot.lane.b32.xlu0 %v309, 112
    %v355 = vpop.permute.xlu0 %354
    %356 = vrot.lane.b32.xlu0 %v315, 112
    %v357 = vpop.permute.xlu0 %356
    %v358 = vsel %vm154, %v347, %v349
    %v359 = vsel %vm154, %v349, %v351
    %v360 = vsel %vm154, %v353, %v355
    %v361 = vsel %vm154, %v355, %v357
    %v366 = vsel %vm93, %v358, 0.0
    %v367 = vsel %vm94, %v359, 0.0
    %v368 = vsel %vm93, %v360, 0.0
    %v369 = vsel %vm94, %v361, 0.0
    %370 = vrot.lane.b32.xlu0 %v306, 110
    %v371 = vpop.permute.xlu0 %370
    %372 = vrot.lane.b32.xlu0 %v307, 110
    %v373 = vpop.permute.xlu0 %372
    %374 = vrot.lane.b32.xlu0 %v314, 110
    %v375 = vpop.permute.xlu0 %374
    %376 = vrot.lane.b32.xlu0 %v308, 110
    %v377 = vpop.permute.xlu0 %376
    %378 = vrot.lane.b32.xlu0 %v309, 110
    %v379 = vpop.permute.xlu0 %378
    %380 = vrot.lane.b32.xlu0 %v315, 110
    %v381 = vpop.permute.xlu0 %380
    %v382 = vsel %vm179, %v371, %v373
    %v383 = vsel %vm179, %v373, %v375
    %v384 = vsel %vm179, %v377, %v379
    %v385 = vsel %vm179, %v379, %v381
    %v390 = vsel %vm99, %v382, 0.0
    %v391 = vsel %vm100, %v383, 0.0
    %v392 = vsel %vm99, %v384, 0.0
    %v393 = vsel %vm100, %v385, 0.0
    %394 = vrot.lane.b32.xlu0 %v306, 96
    %v395 = vpop.permute.xlu0 %394
    %396 = vrot.lane.b32.xlu0 %v307, 96
    %v397 = vpop.permute.xlu0 %396
    %398 = vrot.lane.b32.xlu0 %v314, 96
    %v399 = vpop.permute.xlu0 %398
    %400 = vrot.lane.b32.xlu0 %v308, 96
    %v401 = vpop.permute.xlu0 %400
    %402 = vrot.lane.b32.xlu0 %v309, 96
    %v403 = vpop.permute.xlu0 %402
    %404 = vrot.lane.b32.xlu0 %v315, 96
    %v405 = vpop.permute.xlu0 %404
    %v406 = vsel %vm204, %v395, %v397
    %v407 = vsel %vm204, %v397, %v399
    %v408 = vsel %vm204, %v401, %v403
    %v409 = vsel %vm204, %v403, %v405
    %v414 = vsel %vm93, %v406, 0.0
    %v415 = vsel %vm94, %v407, 0.0
    %v416 = vsel %vm93, %v408, 0.0
    %v417 = vsel %vm94, %v409, 0.0
    %418 = vrot.lane.b32.xlu0 %v306, 94
    %v419 = vpop.permute.xlu0 %418
    %420 = vrot.lane.b32.xlu0 %v307, 94
    %v421 = vpop.permute.xlu0 %420
    %422 = vrot.lane.b32.xlu0 %v314, 94
    %v423 = vpop.permute.xlu0 %422
    %424 = vrot.lane.b32.xlu0 %v308, 94
    %v425 = vpop.permute.xlu0 %424
    %426 = vrot.lane.b32.xlu0 %v309, 94
    %v427 = vpop.permute.xlu0 %426
    %428 = vrot.lane.b32.xlu0 %v315, 94
    %v429 = vpop.permute.xlu0 %428
    %v430 = vsel %vm229, %v419, %v421
    %v431 = vsel %vm229, %v421, %v423
    %v432 = vsel %vm229, %v425, %v427
    %v433 = vsel %vm229, %v427, %v429
    %v438 = vsel %vm99, %v430, 0.0
    %v439 = vsel %vm100, %v431, 0.0
    %v440 = vsel %vm99, %v432, 0.0
    %v441 = vsel %vm100, %v433, 0.0
    %442 = vrot.lane.b32.xlu0 %v306, 127
    %v443 = vpop.permute.xlu0 %442
    %444 = vrot.lane.b32.xlu0 %v307, 127
    %v445 = vpop.permute.xlu0 %444
    %446 = vrot.lane.b32.xlu0 %v314, 127
    %v447 = vpop.permute.xlu0 %446
    %448 = vrot.lane.b32.xlu0 %v308, 127
    %v449 = vpop.permute.xlu0 %448
    %450 = vrot.lane.b32.xlu0 %v309, 127
    %v451 = vpop.permute.xlu0 %450
    %452 = vrot.lane.b32.xlu0 %v315, 127
    %v453 = vpop.permute.xlu0 %452
    %v454 = vsel %vm254, %v443, %v445
    %v455 = vsel %vm254, %v445, %v447
    %v456 = vsel %vm254, %v449, %v451
    %v457 = vsel %vm254, %v451, %v453
    %462 = vrot.lane.b32.xlu0 %v306, 111
    %v463 = vpop.permute.xlu0 %462
    %464 = vrot.lane.b32.xlu0 %v307, 111
    %v465 = vpop.permute.xlu0 %464
    %466 = vrot.lane.b32.xlu0 %v314, 111
    %v467 = vpop.permute.xlu0 %466
    %468 = vrot.lane.b32.xlu0 %v308, 111
    %v469 = vpop.permute.xlu0 %468
    %470 = vrot.lane.b32.xlu0 %v309, 111
    %v471 = vpop.permute.xlu0 %470
    %472 = vrot.lane.b32.xlu0 %v315, 111
    %v473 = vpop.permute.xlu0 %472
    %v474 = vsel %vm275, %v463, %v465
    %v475 = vsel %vm275, %v465, %v467
    %v476 = vsel %vm275, %v469, %v471
    %v477 = vsel %vm275, %v471, %v473
    %482 = vrot.lane.b32.xlu0 %v306, 95
    %v483 = vpop.permute.xlu0 %482
    %484 = vrot.lane.b32.xlu0 %v307, 95
    %v485 = vpop.permute.xlu0 %484
    %486 = vrot.lane.b32.xlu0 %v314, 95
    %v487 = vpop.permute.xlu0 %486
    %488 = vrot.lane.b32.xlu0 %v308, 95
    %v489 = vpop.permute.xlu0 %488
    %490 = vrot.lane.b32.xlu0 %v309, 95
    %v491 = vpop.permute.xlu0 %490
    %492 = vrot.lane.b32.xlu0 %v315, 95
    %v493 = vpop.permute.xlu0 %492
    %v494 = vsel %vm296, %v483, %v485
    %v495 = vsel %vm296, %v485, %v487
    %v496 = vsel %vm296, %v489, %v491
    %v497 = vsel %vm296, %v491, %v493
    %v502 = vld [vmem:[#allocation5] sm:$0xff]
    %v503 = vld [vmem:[#allocation5 + $0x8] sm:$0xff]
    %v504 = vld [vmem:[#allocation5 + $0x10] sm:$0xff]
    %v505 = vld [vmem:[#allocation5 + $0x18] sm:$0xff]
    %v506 = vld [vmem:[%s2] sm:$0xff]
    %v507 = vld [vmem:[%s2 + $0x8] sm:$0xff]
    %509 = vset.pattern.permute.xlu0 0
    %510 = vperm.xlu0 %509, %v506
    %v511 = vpop.permute.xlu0 %510
    %514 = vset.pattern.permute.xlu0 0
    %515 = vperm.xlu0 %514, %v507
    %v516 = vpop.permute.xlu0 %515
    %vm518 = vcmask 130048
    %v520 = vsel %vm518, %v503, 0
    %v523 = vsel %vm518, %v505, 0
    %525 = vmatprep.subr.mxu0 %v106
    %526 = vmatpush1.msra.mxu0 %v105
    %527 = vmatprep.subr.mxu0 %v108
    %528 = vmatpush1.msra.mxu0 %v107
    %529 = vmatprep.subr.mxu0 %v256
    %530 = vmatpush1.msra.mxu0 %v255
    %531 = vmatprep.subr.mxu0 %v258
    %532 = vmatpush1.msra.mxu0 %v257
    %533 = vmatprep.subr.mxu0 %v139
    %534 = vmatpush1.msra.mxu0 %v138
    %535 = vmatprep.subr.mxu0 %v141
    %536 = vmatpush1.msra.mxu0 %v140
    %537 = vmatprep.subr.mxu0 %v164
    %538 = vmatpush1.msra.mxu0 %v163
    %539 = vmatprep.subr.mxu0 %v166
    %540 = vmatpush1.msra.mxu0 %v165
    %541 = vmatprep.subr.mxu0 %v277
    %542 = vmatpush1.msra.mxu0 %v276
    %543 = vmatprep.subr.mxu0 %v279
    %544 = vmatpush1.msra.mxu0 %v278
    %545 = vmatprep.subr.mxu0 %v189
    %546 = vmatpush1.msra.mxu0 %v188
    %547 = vmatprep.subr.mxu0 %v191
    %548 = vmatpush1.msra.mxu0 %v190
    %549 = vmatprep.subr.mxu0 %v214
    %550 = vmatpush1.msra.mxu0 %v213
    %551 = vmatprep.subr.mxu0 %v216
    %552 = vmatpush1.msra.mxu0 %v215
    %553 = vmatprep.subr.mxu0 %v298
    %554 = vmatpush1.msra.mxu0 %v297
    %555 = vmatprep.subr.mxu0 %v300
    %556 = vmatpush1.msra.mxu0 %v299
    %557 = vmatprep.subr.mxu0 %v239
    %558 = vmatpush1.msra.mxu0 %v238
    %559 = vmatprep.subr.mxu0 %v241
    %560 = vmatpush1.msra.mxu0 %v240
    %561 = vmatprep.subr.mxu0 0.0
    %562 = vmatpush1.msra.mxu0 0.0
    %563 = vmatprep.subr.mxu0 0.0
    %564 = vmatpush1.msra.mxu0 0.0
    %565 = vmatprep.subr.mxu0 0.0
    %566 = vmatpush1.msra.mxu0 0.0
    %567 = vmatprep.subr.mxu0 0.0
    %568 = vmatpush1.msra.mxu0 0.0
    %569 = vmatprep.subr.mxu0 0.0
    %570 = vmatpush1.msra.mxu0 0.0
    %571 = vmatprep.subr.mxu0 0.0
    %572 = vmatpush1.msra.mxu0 0.0
    %573 = vmatprep.subr.mxu0 0.0
    %574 = vmatpush1.msra.mxu0 0.0
    %575 = vmatprep.subr.mxu0 0.0
    %576 = vmatpush1.msra.mxu0 0.0
    %577 = vmatprep.subr.mxu0 0.0
    %578 = vmatpush1.msra.mxu0 0.0
    %579 = vmatprep.subr.mxu0 0.0
    %580 = vmatpush1.msra.mxu0 0.0
    %581 = vmatprep.subr.mxu0 0.0
    %582 = vmatpush1.msra.mxu0 0.0
    %583 = vmatprep.subr.mxu0 0.0
    %584 = vmatpush1.msra.mxu0 0.0
    %585 = vmatprep.subr.mxu0 0.0
    %586 = vmatpush1.msra.mxu0 0.0
    %587 = vmatprep.subr.mxu0 0.0
    %588 = vmatpush1.msra.mxu0 0.0
    %589 = vmatprep.mubr.f32.mxu0 %v520
    %590 = vmatmul.mubr.f32.gmra.mrb[0].mxu0 %v502
    %v591 = vpop.f32.mrb[0].mxu0
    %v592 = vadd.f32 %v511, %v591
    %v593 = vpop.f32.mrb[0].mxu0
    %v594 = vadd.f32 %v511, %v593
    %595 = vmatprep.mubr.f32.mxu0 %v523
    %596 = vmatmul.mubr.f32.gmra.mrb[0].mxu0 %v504
    %v597 = vpop.f32.mrb[0].mxu0
    %v598 = vadd.f32 %v516, %v597
    %v599 = vpop.f32.mrb[0].mxu0
    %v600 = vadd.f32 %v516, %v599
    %601 = vdwg.mxu0
    %602 = vmatprep.subr.mxu0 %v311
    %603 = vmatpush1.msra.mxu0 %v310
    %604 = vmatprep.subr.mxu0 %v313
    %605 = vmatpush1.msra.mxu0 %v312
    %606 = vmatprep.subr.mxu0 %v455
    %607 = vmatpush1.msra.mxu0 %v454
    %608 = vmatprep.subr.mxu0 %v457
    %609 = vmatpush1.msra.mxu0 %v456
    %610 = vmatprep.subr.mxu0 %v343
    %611 = vmatpush1.msra.mxu0 %v342
    %612 = vmatprep.subr.mxu0 %v345
    %613 = vmatpush1.msra.mxu0 %v344
    %614 = vmatprep.subr.mxu0 %v367
    %615 = vmatpush1.msra.mxu0 %v366
    %616 = vmatprep.subr.mxu0 %v369
    %617 = vmatpush1.msra.mxu0 %v368
    %618 = vmatprep.subr.mxu0 %v475
    %619 = vmatpush1.msra.mxu0 %v474
    %620 = vmatprep.subr.mxu0 %v477
    %621 = vmatpush1.msra.mxu0 %v476
    %622 = vmatprep.subr.mxu0 %v391
    %623 = vmatpush1.msra.mxu0 %v390
    %624 = vmatprep.subr.mxu0 %v393
    %625 = vmatpush1.msra.mxu0 %v392
    %626 = vmatprep.subr.mxu0 %v415
    %627 = vmatpush1.msra.mxu0 %v414
    %628 = vmatprep.subr.mxu0 %v417
    %629 = vmatpush1.msra.mxu0 %v416
    %630 = vmatprep.subr.mxu0 %v495
    %631 = vmatpush1.msra.mxu0 %v494
    %632 = vmatprep.subr.mxu0 %v497
    %633 = vmatpush1.msra.mxu0 %v496
    %634 = vmatprep.subr.mxu0 %v439
    %635 = vmatpush1.msra.mxu0 %v438
    %636 = vmatprep.subr.mxu0 %v441
    %637 = vmatpush1.msra.mxu0 %v440
    %638 = vmatprep.subr.mxu0 0.0
    %639 = vmatpush1.msra.mxu0 0.0
    %640 = vmatprep.subr.mxu0 0.0
    %641 = vmatpush1.msra.mxu0 0.0
    %642 = vmatprep.subr.mxu0 0.0
    %643 = vmatpush1.msra.mxu0 0.0
    %644 = vmatprep.subr.mxu0 0.0
    %645 = vmatpush1.msra.mxu0 0.0
    %646 = vmatprep.subr.mxu0 0.0
    %647 = vmatpush1.msra.mxu0 0.0
    %648 = vmatprep.subr.mxu0 0.0
    %649 = vmatpush1.msra.mxu0 0.0
    %650 = vmatprep.subr.mxu0 0.0
    %651 = vmatpush1.msra.mxu0 0.0
    %652 = vmatprep.subr.mxu0 0.0
    %653 = vmatpush1.msra.mxu0 0.0
    %654 = vmatprep.subr.mxu0 0.0
    %655 = vmatpush1.msra.mxu0 0.0
    %656 = vmatprep.subr.mxu0 0.0
    %657 = vmatpush1.msra.mxu0 0.0
    %658 = vmatprep.subr.mxu0 0.0
    %659 = vmatpush1.msra.mxu0 0.0
    %660 = vmatprep.subr.mxu0 0.0
    %661 = vmatpush1.msra.mxu0 0.0
    %662 = vmatprep.subr.mxu0 0.0
    %663 = vmatpush1.msra.mxu0 0.0
    %664 = vmatprep.subr.mxu0 0.0
    %665 = vmatpush1.msra.mxu0 0.0
    %666 = vmatprep.mubr.f32.mxu0 %v520
    %667 = vmatmul.mubr.f32.gmra.mrb[0].mxu0 %v502
    %v668 = vpop.f32.mrb[0].mxu0
    %v669 = vadd.f32 %v511, %v668
    %v670 = vpop.f32.mrb[0].mxu0
    %v671 = vadd.f32 %v511, %v670
    %672 = vmatprep.mubr.f32.mxu0 %v523
    %673 = vmatmul.mubr.f32.gmra.mrb[0].mxu0 %v504
    %v674 = vpop.f32.mrb[0].mxu0
    %v675 = vadd.f32 %v516, %v674
    %v676 = vpop.f32.mrb[0].mxu0
    %v677 = vadd.f32 %v516, %v676
    %678 = vdwg.mxu0
    %v679 = vld [vmem:[#allocation7] sm:$0xff]
    %v680 = vld [vmem:[#allocation7 + $0x8] sm:$0xff]
    %v681 = vld [vmem:[#allocation7 + $0x10] sm:$0xff]
    %v682 = vld [vmem:[#allocation7 + $0x18] sm:$0xff]
    %v683 = vld [vmem:[#allocation7 + $0x20] sm:$0xff]
    %v684 = vld [vmem:[#allocation7 + $0x28] sm:$0xff]
    %v685 = vld [vmem:[#allocation7 + $0x30] sm:$0xff]
    %v686 = vld [vmem:[#allocation7 + $0x38] sm:$0xff]
    %v687 = vld [vmem:[#allocation7 + $0x40] sm:$0xff]
    %v688 = vld [vmem:[#allocation7 + $0x48] sm:$0xff]
    %v689 = vld [vmem:[#allocation7 + $0x50] sm:$0xff]
    %v690 = vld [vmem:[#allocation7 + $0x58] sm:$0xff]
    %v691 = vld [vmem:[#allocation7 + $0x60] sm:$0xff]
    %v692 = vld [vmem:[#allocation7 + $0x68] sm:$0xff]
    %v693 = vld [vmem:[#allocation7 + $0x70] sm:$0xff]
    %v694 = vld [vmem:[#allocation7 + $0x78] sm:$0xff]
    %v695 = vld [vmem:[#allocation7 + $0x80] sm:$0xff]
    %v696 = vld [vmem:[#allocation7 + $0x88] sm:$0xff]
    %v697 = vld [vmem:[#allocation7 + $0x90] sm:$0xff]
    %v698 = vld [vmem:[#allocation7 + $0x98] sm:$0xff]
    %v699 = vld [vmem:[#allocation7 + $0xa0] sm:$0xff]
    %v700 = vld [vmem:[#allocation7 + $0xa8] sm:$0xff]
    %v701 = vld [vmem:[#allocation7 + $0xb0] sm:$0xff]
    %v702 = vld [vmem:[#allocation7 + $0xb8] sm:$0xff]
    %v703 = vld [vmem:[#allocation7 + $0xc0] sm:$0xff]
    %v704 = vld [vmem:[#allocation7 + $0xc8] sm:$0xff]
    %v705 = vld [vmem:[#allocation7 + $0xd0] sm:$0xff]
    %v706 = vld [vmem:[#allocation7 + $0xd8] sm:$0xff]
    %v707 = vld [vmem:[#allocation7 + $0xe0] sm:$0xff]
    %v708 = vld [vmem:[#allocation7 + $0xe8] sm:$0xff]
    %v709 = vld [vmem:[#allocation7 + $0xf0] sm:$0xff]
    %v710 = vld [vmem:[#allocation7 + $0xf8] sm:$0xff]
    %v711 = vld [vmem:[#allocation7 + $0x100] sm:$0xff]
    %v712 = vld [vmem:[#allocation7 + $0x108] sm:$0xff]
    %v713 = vld [vmem:[#allocation7 + $0x110] sm:$0xff]
    %v714 = vld [vmem:[#allocation7 + $0x118] sm:$0xff]
    %v715 = vld [vmem:[#allocation7 + $0x120] sm:$0xff]
    %v716 = vld [vmem:[#allocation7 + $0x128] sm:$0xff]
    %v717 = vld [vmem:[#allocation7 + $0x130] sm:$0xff]
    %v718 = vld [vmem:[#allocation7 + $0x138] sm:$0xff]
    %v719 = vld [vmem:[#allocation7 + $0x140] sm:$0xff]
    %v720 = vld [vmem:[#allocation7 + $0x148] sm:$0xff]
    %v721 = vld [vmem:[#allocation7 + $0x150] sm:$0xff]
    %v722 = vld [vmem:[#allocation7 + $0x158] sm:$0xff]
    %v723 = vld [vmem:[#allocation7 + $0x160] sm:$0xff]
    %v724 = vld [vmem:[#allocation7 + $0x168] sm:$0xff]
    %v725 = vld [vmem:[#allocation7 + $0x170] sm:$0xff]
    %v726 = vld [vmem:[#allocation7 + $0x178] sm:$0xff]
    %v727 = vld [vmem:[#allocation7 + $0x180] sm:$0xff]
    %v728 = vld [vmem:[#allocation7 + $0x188] sm:$0xff]
    %v729 = vld [vmem:[#allocation7 + $0x190] sm:$0xff]
    %v730 = vld [vmem:[#allocation7 + $0x198] sm:$0xff]
    %v731 = vld [vmem:[#allocation7 + $0x1a0] sm:$0xff]
    %v732 = vld [vmem:[#allocation7 + $0x1a8] sm:$0xff]
    %v733 = vld [vmem:[#allocation7 + $0x1b0] sm:$0xff]
    %v734 = vld [vmem:[#allocation7 + $0x1b8] sm:$0xff]
    %v735 = vld [vmem:[#allocation7 + $0x1c0] sm:$0xff]
    %v736 = vld [vmem:[#allocation7 + $0x1c8] sm:$0xff]
    %v737 = vld [vmem:[#allocation7 + $0x1d0] sm:$0xff]
    %v738 = vld [vmem:[#allocation7 + $0x1d8] sm:$0xff]
    %v739 = vld [vmem:[#allocation7 + $0x1e0] sm:$0xff]
    %v740 = vld [vmem:[#allocation7 + $0x1e8] sm:$0xff]
    %v741 = vld [vmem:[#allocation7 + $0x1f0] sm:$0xff]
    %v742 = vld [vmem:[#allocation7 + $0x1f8] sm:$0xff]
    %743 = vmatprep.subr.mxu0 %v680
    %744 = vmatpush1.xpose.msra.mxu0 %v679
    %745 = vmatprep.subr.mxu0 %v682
    %746 = vmatpush1.xpose.msra.mxu0 %v681
    %747 = vmatprep.subr.mxu0 %v684
    %748 = vmatpush1.xpose.msra.mxu0 %v683
    %749 = vmatprep.subr.mxu0 %v686
    %750 = vmatpush1.xpose.msra.mxu0 %v685
    %751 = vmatprep.subr.mxu0 %v688
    %752 = vmatpush1.xpose.msra.mxu0 %v687
    %753 = vmatprep.subr.mxu0 %v690
    %754 = vmatpush1.xpose.msra.mxu0 %v689
    %755 = vmatprep.subr.mxu0 %v692
    %756 = vmatpush1.xpose.msra.mxu0 %v691
    %757 = vmatprep.subr.mxu0 %v694
    %758 = vmatpush1.xpose.msra.mxu0 %v693
    %759 = vmatprep.subr.mxu0 %v696
    %760 = vmatpush1.xpose.msra.mxu0 %v695
    %761 = vmatprep.subr.mxu0 %v698
    %762 = vmatpush1.xpose.msra.mxu0 %v697
    %763 = vmatprep.subr.mxu0 %v700
    %764 = vmatpush1.xpose.msra.mxu0 %v699
    %765 = vmatprep.subr.mxu0 %v702
    %766 = vmatpush1.xpose.msra.mxu0 %v701
    %767 = vmatprep.subr.mxu0 %v704
    %768 = vmatpush1.xpose.msra.mxu0 %v703
    %769 = vmatprep.subr.mxu0 %v706
    %770 = vmatpush1.xpose.msra.mxu0 %v705
    %771 = vmatprep.subr.mxu0 %v708
    %772 = vmatpush1.xpose.msra.mxu0 %v707
    %773 = vmatprep.subr.mxu0 %v710
    %774 = vmatpush1.xpose.msra.mxu0 %v709
    %775 = vmatprep.subr.mxu0 %v712
    %776 = vmatpush1.xpose.msra.mxu0 %v711
    %777 = vmatprep.subr.mxu0 %v714
    %778 = vmatpush1.xpose.msra.mxu0 %v713
    %779 = vmatprep.subr.mxu0 %v716
    %780 = vmatpush1.xpose.msra.mxu0 %v715
    %781 = vmatprep.subr.mxu0 %v718
    %782 = vmatpush1.xpose.msra.mxu0 %v717
    %783 = vmatprep.subr.mxu0 %v720
    %784 = vmatpush1.xpose.msra.mxu0 %v719
    %785 = vmatprep.subr.mxu0 %v722
    %786 = vmatpush1.xpose.msra.mxu0 %v721
    %787 = vmatprep.subr.mxu0 %v724
    %788 = vmatpush1.xpose.msra.mxu0 %v723
    %789 = vmatprep.subr.mxu0 %v726
    %790 = vmatpush1.xpose.msra.mxu0 %v725
    %791 = vmatprep.subr.mxu0 %v728
    %792 = vmatpush1.xpose.msra.mxu0 %v727
    %793 = vmatprep.subr.mxu0 %v730
    %794 = vmatpush1.xpose.msra.mxu0 %v729
    %795 = vmatprep.subr.mxu0 %v732
    %796 = vmatpush1.xpose.msra.mxu0 %v731
    %797 = vmatprep.subr.mxu0 %v734
    %798 = vmatpush1.xpose.msra.mxu0 %v733
    %799 = vmatprep.subr.mxu0 %v736
    %800 = vmatpush1.xpose.msra.mxu0 %v735
    %801 = vmatprep.subr.mxu0 %v738
    %802 = vmatpush1.xpose.msra.mxu0 %v737
    %803 = vmatprep.subr.mxu0 %v740
    %804 = vmatpush1.xpose.msra.mxu0 %v739
    %805 = vmatprep.subr.mxu0 %v742
    %806 = vmatpush1.xpose.msra.mxu0 %v741
    %807 = vmatprep.mubr.f32.mxu0 %v594
    %808 = vmatmul.mubr.f32.gmra.mrb[0].mxu0 %v592
    %v809 = vpop.f32.mrb[0].mxu0
    %v810 = vadd.f32 0.0, %v809
    %v811 = vpop.f32.mrb[0].mxu0
    %v812 = vadd.f32 0.0, %v811
    %813 = vmatprep.mubr.f32.mxu0 %v600
    %814 = vmatmul.mubr.f32.gmra.mrb[0].mxu0 %v598
    %v815 = vpop.f32.mrb[0].mxu0
    %v816 = vadd.f32 0.0, %v815
    %v817 = vpop.f32.mrb[0].mxu0
    %v818 = vadd.f32 0.0, %v817
    %819 = vmatprep.mubr.f32.mxu0 %v671
    %820 = vmatmul.mubr.f32.gmra.mrb[0].mxu0 %v669
    %v821 = vpop.f32.mrb[0].mxu0
    %v822 = vadd.f32 0.0, %v821
    %v823 = vpop.f32.mrb[0].mxu0
    %v824 = vadd.f32 0.0, %v823
    %825 = vmatprep.mubr.f32.mxu0 %v677
    %826 = vmatmul.mubr.f32.gmra.mrb[0].mxu0 %v675
    %v827 = vpop.f32.mrb[0].mxu0
    %v828 = vadd.f32 0.0, %v827
    %v829 = vpop.f32.mrb[0].mxu0
    %v830 = vadd.f32 0.0, %v829
    %831 = vdwg.mxu0
    %832 = vmatprep.subr.mxu0 %v594
    %833 = vmatpush1.xpose.msra.mxu0 %v592
    %834 = vmatprep.subr.mxu0 %v600
    %835 = vmatpush1.xpose.msra.mxu0 %v598
    %836 = vmatprep.subr.mxu0 0.0
    %837 = vmatpush1.xpose.msra.mxu0 0.0
    %838 = vmatprep.subr.mxu0 0.0
    %839 = vmatpush1.xpose.msra.mxu0 0.0
    %840 = vmatprep.subr.mxu0 0.0
    %841 = vmatpush1.xpose.msra.mxu0 0.0
    %842 = vmatprep.subr.mxu0 0.0
    %843 = vmatpush1.xpose.msra.mxu0 0.0
    %844 = vmatprep.subr.mxu0 0.0
    %845 = vmatpush1.xpose.msra.mxu0 0.0
    %846 = vmatprep.subr.mxu0 0.0
    %847 = vmatpush1.xpose.msra.mxu0 0.0
    %848 = vmatprep.subr.mxu0 0.0
    %849 = vmatpush1.xpose.msra.mxu0 0.0
    %850 = vmatprep.subr.mxu0 0.0
    %851 = vmatpush1.xpose.msra.mxu0 0.0
    %852 = vmatprep.subr.mxu0 0.0
    %853 = vmatpush1.xpose.msra.mxu0 0.0
    %854 = vmatprep.subr.mxu0 0.0
    %855 = vmatpush1.xpose.msra.mxu0 0.0
    %856 = vmatprep.subr.mxu0 0.0
    %857 = vmatpush1.xpose.msra.mxu0 0.0
    %858 = vmatprep.subr.mxu0 0.0
    %859 = vmatpush1.xpose.msra.mxu0 0.0
    %860 = vmatprep.subr.mxu0 0.0
    %861 = vmatpush1.xpose.msra.mxu0 0.0
    %862 = vmatprep.subr.mxu0 0.0
    %863 = vmatpush1.xpose.msra.mxu0 0.0
    %864 = vmatprep.subr.mxu0 0.0
    %865 = vmatpush1.xpose.msra.mxu0 0.0
    %866 = vmatprep.subr.mxu0 0.0
    %867 = vmatpush1.xpose.msra.mxu0 0.0
    %868 = vmatprep.subr.mxu0 0.0
    %869 = vmatpush1.xpose.msra.mxu0 0.0
    %870 = vmatprep.subr.mxu0 0.0
    %871 = vmatpush1.xpose.msra.mxu0 0.0
    %872 = vmatprep.subr.mxu0 0.0
    %873 = vmatpush1.xpose.msra.mxu0 0.0
    %874 = vmatprep.subr.mxu0 0.0
    %875 = vmatpush1.xpose.msra.mxu0 0.0
    %876 = vmatprep.subr.mxu0 0.0
    %877 = vmatpush1.xpose.msra.mxu0 0.0
    %878 = vmatprep.subr.mxu0 0.0
    %879 = vmatpush1.xpose.msra.mxu0 0.0
    %880 = vmatprep.subr.mxu0 0.0
    %881 = vmatpush1.xpose.msra.mxu0 0.0
    %882 = vmatprep.subr.mxu0 0.0
    %883 = vmatpush1.xpose.msra.mxu0 0.0
    %884 = vmatprep.subr.mxu0 0.0
    %885 = vmatpush1.xpose.msra.mxu0 0.0
    %886 = vmatprep.subr.mxu0 0.0
    %887 = vmatpush1.xpose.msra.mxu0 0.0
    %888 = vmatprep.subr.mxu0 0.0
    %889 = vmatpush1.xpose.msra.mxu0 0.0
    %890 = vmatprep.subr.mxu0 0.0
    %891 = vmatpush1.xpose.msra.mxu0 0.0
    %892 = vmatprep.subr.mxu0 0.0
    %893 = vmatpush1.xpose.msra.mxu0 0.0
    %894 = vmatprep.subr.mxu0 0.0
    %895 = vmatpush1.xpose.msra.mxu0 0.0
    %896 = vmatprep.mubr.f32.mxu0 %v594
    %897 = vmatmul.mubr.f32.gmra.mrb[0].mxu0 %v592
    %v898 = vpop.f32.mrb[0].mxu0
    %v899 = vadd.f32 0.0, %v898
    %v900 = vpop.f32.mrb[0].mxu0
    %901 = vmatprep.mubr.f32.mxu0 %v600
    %902 = vmatmul.mubr.f32.gmra.mrb[0].mxu0 %v598
    %v903 = vpop.f32.mrb[0].mxu0
    %v904 = vadd.f32 0.0, %v903
    %v905 = vpop.f32.mrb[0].mxu0
    %906 = vdwg.mxu0
    %v907 = vmul.f32 %v899, 0.0625
    %v908 = vmul.f32 %v904, 0.0625
    %v909 = vsel %vm518, %v907, -inf
    %910 = vmax.xlane.f32.xlu0 %v909
    %v911 = vpop.xlane.xlu0 %910
    %v912 = vsel %vm518, %v908, -inf
    %913 = vmax.xlane.f32.xlu0 %v912
    %v914 = vpop.xlane.xlu0 %913
    %v915 = vsub.f32 %v907, %v911
    %v916 = vsub.f32 %v908, %v914
    %v917 = vmul.f32 %v915, 1.442695
    %v918 = vpow.pop %v917
    %v919 = vmul.f32 %v916, 1.442695
    %v920 = vpow.pop %v919
    %v921 = vsel %vm518, %v918, 0.0
    %922 = vadd.xlane.f32.xlu0 %v921
    %v923 = vpop.xlane.xlu0 %922
    %v924 = vsel %vm518, %v920, 0.0
    %925 = vadd.xlane.f32.xlu0 %v924
    %v926 = vpop.xlane.xlu0 %925
    %v927 = vrcp.pop %v923
    %v928 = vrcp.pop %v926
    %v929 = vmul.f32 %v918, %v927
    %v930 = vmul.f32 %v920, %v928
    %v931 = vld [vmem:[%s4] sm:$0x3]
    %v933 = vlaneseq
    %v934 = vshrl.u32 %v933, 7
    %v935 = vsub.s32 0, %v934
    %v936 = vrot.slane %v931, %v935
    %v937 = vlaneseq
    %v938 = vshrl.u32 %v937, 7
    %v939 = vsub.s32 1, %v938
    %v940 = vrot.slane %v931, %v939
    %v944 = vsel %vm518, %v929, 0
    %v947 = vsel %vm518, %v930, 0
    %949 = vmatprep.subr.mxu0 %v812
    %950 = vmatpush1.msra.mxu0 %v810
    %951 = vmatprep.subr.mxu0 %v818
    %952 = vmatpush1.msra.mxu0 %v816
    %953 = vmatprep.subr.mxu0 0.0
    %954 = vmatpush1.msra.mxu0 0.0
    %955 = vmatprep.subr.mxu0 0.0
    %956 = vmatpush1.msra.mxu0 0.0
    %957 = vmatprep.subr.mxu0 0.0
    %958 = vmatpush1.msra.mxu0 0.0
    %959 = vmatprep.subr.mxu0 0.0
    %960 = vmatpush1.msra.mxu0 0.0
    %961 = vmatprep.subr.mxu0 0.0
    %962 = vmatpush1.msra.mxu0 0.0
    %963 = vmatprep.subr.mxu0 0.0
    %964 = vmatpush1.msra.mxu0 0.0
    %965 = vmatprep.subr.mxu0 0.0
    %966 = vmatpush1.msra.mxu0 0.0
    %967 = vmatprep.subr.mxu0 0.0
    %968 = vmatpush1.msra.mxu0 0.0
    %969 = vmatprep.subr.mxu0 0.0
    %970 = vmatpush1.msra.mxu0 0.0
    %971 = vmatprep.subr.mxu0 0.0
    %972 = vmatpush1.msra.mxu0 0.0
    %973 = vmatprep.subr.mxu0 0.0
    %974 = vmatpush1.msra.mxu0 0.0
    %975 = vmatprep.subr.mxu0 0.0
    %976 = vmatpush1.msra.mxu0 0.0
    %977 = vmatprep.subr.mxu0 0.0
    %978 = vmatpush1.msra.mxu0 0.0
    %979 = vmatprep.subr.mxu0 0.0
    %980 = vmatpush1.msra.mxu0 0.0
    %981 = vmatprep.subr.mxu0 0.0
    %982 = vmatpush1.msra.mxu0 0.0
    %983 = vmatprep.subr.mxu0 0.0
    %984 = vmatpush1.msra.mxu0 0.0
    %985 = vmatprep.subr.mxu0 0.0
    %986 = vmatpush1.msra.mxu0 0.0
    %987 = vmatprep.subr.mxu0 0.0
    %988 = vmatpush1.msra.mxu0 0.0
    %989 = vmatprep.subr.mxu0 0.0
    %990 = vmatpush1.msra.mxu0 0.0
    %991 = vmatprep.subr.mxu0 0.0
    %992 = vmatpush1.msra.mxu0 0.0
    %993 = vmatprep.subr.mxu0 0.0
    %994 = vmatpush1.msra.mxu0 0.0
    %995 = vmatprep.subr.mxu0 0.0
    %996 = vmatpush1.msra.mxu0 0.0
    %997 = vmatprep.subr.mxu0 0.0
    %998 = vmatpush1.msra.mxu0 0.0
    %999 = vmatprep.subr.mxu0 0.0
    %1000 = vmatpush1.msra.mxu0 0.0
    %1001 = vmatprep.subr.mxu0 0.0
    %1002 = vmatpush1.msra.mxu0 0.0
    %1003 = vmatprep.subr.mxu0 0.0
    %1004 = vmatpush1.msra.mxu0 0.0
    %1005 = vmatprep.subr.mxu0 0.0
    %1006 = vmatpush1.msra.mxu0 0.0
    %1007 = vmatprep.subr.mxu0 0.0
    %1008 = vmatpush1.msra.mxu0 0.0
    %1009 = vmatprep.subr.mxu0 0.0
    %1010 = vmatpush1.msra.mxu0 0.0
    %1011 = vmatprep.subr.mxu0 0.0
    %1012 = vmatpush1.msra.mxu0 0.0
    %1013 = vmatprep.mubr.f32.mxu0 0.0
    %1014 = vmatmul.mubr.f32.gmra.mrb[0].mxu0 %v944
    %v1015 = vpop.f32.mrb[0].mxu0
    %v1016 = vadd.f32 %v936, %v1015
    %v1017 = vpop.f32.mrb[0].mxu0
    %v1018 = vadd.f32 %v940, %v1017
    %1019 = vmatprep.mubr.f32.mxu0 0.0
    %1020 = vmatmul.mubr.f32.gmra.mrb[0].mxu0 %v947
    %v1021 = vpop.f32.mrb[0].mxu0
    %v1022 = vadd.f32 %v936, %v1021
    %v1023 = vpop.f32.mrb[0].mxu0
    %v1024 = vadd.f32 %v940, %v1023
    %1025 = vdwg.mxu0
    %1026 = vst [vmem:[#allocation8] sm:$0xff] %v1016
    %1027 = vst [vmem:[#allocation8 + $0x8] sm:$0xff] %v1018
    %1028 = vst [vmem:[#allocation8 + $0x10] sm:$0xff] %v1022
    %1029 = vst [vmem:[#allocation8 + $0x18] sm:$0xff] %v1024
    %1030 = vmatprep.subr.mxu0 %v671
    %1031 = vmatpush1.xpose.msra.mxu0 %v669
    %1032 = vmatprep.subr.mxu0 %v677
    %1033 = vmatpush1.xpose.msra.mxu0 %v675
    %1034 = vmatprep.subr.mxu0 0.0
    %1035 = vmatpush1.xpose.msra.mxu0 0.0
    %1036 = vmatprep.subr.mxu0 0.0
    %1037 = vmatpush1.xpose.msra.mxu0 0.0
    %1038 = vmatprep.subr.mxu0 0.0
    %1039 = vmatpush1.xpose.msra.mxu0 0.0
    %1040 = vmatprep.subr.mxu0 0.0
    %1041 = vmatpush1.xpose.msra.mxu0 0.0
    %1042 = vmatprep.subr.mxu0 0.0
    %1043 = vmatpush1.xpose.msra.mxu0 0.0
    %1044 = vmatprep.subr.mxu0 0.0
    %1045 = vmatpush1.xpose.msra.mxu0 0.0
    %1046 = vmatprep.subr.mxu0 0.0
    %1047 = vmatpush1.xpose.msra.mxu0 0.0
    %1048 = vmatprep.subr.mxu0 0.0
    %1049 = vmatpush1.xpose.msra.mxu0 0.0
    %1050 = vmatprep.subr.mxu0 0.0
    %1051 = vmatpush1.xpose.msra.mxu0 0.0
    %1052 = vmatprep.subr.mxu0 0.0
    %1053 = vmatpush1.xpose.msra.mxu0 0.0
    %1054 = vmatprep.subr.mxu0 0.0
    %1055 = vmatpush1.xpose.msra.mxu0 0.0
    %1056 = vmatprep.subr.mxu0 0.0
    %1057 = vmatpush1.xpose.msra.mxu0 0.0
    %1058 = vmatprep.subr.mxu0 0.0
    %1059 = vmatpush1.xpose.msra.mxu0 0.0
    %1060 = vmatprep.subr.mxu0 0.0
    %1061 = vmatpush1.xpose.msra.mxu0 0.0
    %1062 = vmatprep.subr.mxu0 0.0
    %1063 = vmatpush1.xpose.msra.mxu0 0.0
    %1064 = vmatprep.subr.mxu0 0.0
    %1065 = vmatpush1.xpose.msra.mxu0 0.0
    %1066 = vmatprep.subr.mxu0 0.0
    %1067 = vmatpush1.xpose.msra.mxu0 0.0
    %1068 = vmatprep.subr.mxu0 0.0
    %1069 = vmatpush1.xpose.msra.mxu0 0.0
    %1070 = vmatprep.subr.mxu0 0.0
    %1071 = vmatpush1.xpose.msra.mxu0 0.0
    %1072 = vmatprep.subr.mxu0 0.0
    %1073 = vmatpush1.xpose.msra.mxu0 0.0
    %1074 = vmatprep.subr.mxu0 0.0
    %1075 = vmatpush1.xpose.msra.mxu0 0.0
    %1076 = vmatprep.subr.mxu0 0.0
    %1077 = vmatpush1.xpose.msra.mxu0 0.0
    %1078 = vmatprep.subr.mxu0 0.0
    %1079 = vmatpush1.xpose.msra.mxu0 0.0
    %1080 = vmatprep.subr.mxu0 0.0
    %1081 = vmatpush1.xpose.msra.mxu0 0.0
    %1082 = vmatprep.subr.mxu0 0.0
    %1083 = vmatpush1.xpose.msra.mxu0 0.0
    %1084 = vmatprep.subr.mxu0 0.0
    %1085 = vmatpush1.xpose.msra.mxu0 0.0
    %1086 = vmatprep.subr.mxu0 0.0
    %1087 = vmatpush1.xpose.msra.mxu0 0.0
    %1088 = vmatprep.subr.mxu0 0.0
    %1089 = vmatpush1.xpose.msra.mxu0 0.0
    %1090 = vmatprep.subr.mxu0 0.0
    %1091 = vmatpush1.xpose.msra.mxu0 0.0
    %1092 = vmatprep.subr.mxu0 0.0
    %1093 = vmatpush1.xpose.msra.mxu0 0.0
    %1094 = vmatprep.mubr.f32.mxu0 %v671
    %1095 = vmatmul.mubr.f32.gmra.mrb[0].mxu0 %v669
    %v1096 = vpop.f32.mrb[0].mxu0
    %v1097 = vadd.f32 0.0, %v1096
    %v1098 = vpop.f32.mrb[0].mxu0
    %1099 = vmatprep.mubr.f32.mxu0 %v677
    %1100 = vmatmul.mubr.f32.gmra.mrb[0].mxu0 %v675
    %v1101 = vpop.f32.mrb[0].mxu0
    %v1102 = vadd.f32 0.0, %v1101
    %v1103 = vpop.f32.mrb[0].mxu0
    %1104 = vdwg.mxu0
    %v1105 = vmul.f32 %v1097, 0.0625
    %v1106 = vmul.f32 %v1102, 0.0625
    %v1107 = vsel %vm518, %v1105, -inf
    %1108 = vmax.xlane.f32.xlu0 %v1107
    %v1109 = vpop.xlane.xlu0 %1108
    %v1110 = vsel %vm518, %v1106, -inf
    %1111 = vmax.xlane.f32.xlu0 %v1110
    %v1112 = vpop.xlane.xlu0 %1111
    %v1113 = vsub.f32 %v1105, %v1109
    %v1114 = vsub.f32 %v1106, %v1112
    %v1115 = vmul.f32 %v1113, 1.442695
    %v1116 = vpow.pop %v1115
    %v1117 = vmul.f32 %v1114, 1.442695
    %v1118 = vpow.pop %v1117
    %v1119 = vsel %vm518, %v1116, 0.0
    %1120 = vadd.xlane.f32.xlu0 %v1119
    %v1121 = vpop.xlane.xlu0 %1120
    %v1122 = vsel %vm518, %v1118, 0.0
    %1123 = vadd.xlane.f32.xlu0 %v1122
    %v1124 = vpop.xlane.xlu0 %1123
    %v1125 = vrcp.pop %v1121
    %v1126 = vrcp.pop %v1124
    %v1127 = vmul.f32 %v1116, %v1125
    %v1128 = vmul.f32 %v1118, %v1126
    %v1129 = vld [vmem:[%s4] sm:$0x3]
    %v1131 = vlaneseq
    %v1132 = vshrl.u32 %v1131, 7
    %v1133 = vsub.s32 0, %v1132
    %v1134 = vrot.slane %v1129, %v1133
    %v1135 = vlaneseq
    %v1136 = vshrl.u32 %v1135, 7
    %v1137 = vsub.s32 1, %v1136
    %v1138 = vrot.slane %v1129, %v1137
    %v1142 = vsel %vm518, %v1127, 0
    %v1145 = vsel %vm518, %v1128, 0
    %1147 = vmatprep.subr.mxu0 %v824
    %1148 = vmatpush1.msra.mxu0 %v822
    %1149 = vmatprep.subr.mxu0 %v830
    %1150 = vmatpush1.msra.mxu0 %v828
    %1151 = vmatprep.subr.mxu0 0.0
    %1152 = vmatpush1.msra.mxu0 0.0
    %1153 = vmatprep.subr.mxu0 0.0
    %1154 = vmatpush1.msra.mxu0 0.0
    %1155 = vmatprep.subr.mxu0 0.0
    %1156 = vmatpush1.msra.mxu0 0.0
    %1157 = vmatprep.subr.mxu0 0.0
    %1158 = vmatpush1.msra.mxu0 0.0
    %1159 = vmatprep.subr.mxu0 0.0
    %1160 = vmatpush1.msra.mxu0 0.0
    %1161 = vmatprep.subr.mxu0 0.0
    %1162 = vmatpush1.msra.mxu0 0.0
    %1163 = vmatprep.subr.mxu0 0.0
    %1164 = vmatpush1.msra.mxu0 0.0
    %1165 = vmatprep.subr.mxu0 0.0
    %1166 = vmatpush1.msra.mxu0 0.0
    %1167 = vmatprep.subr.mxu0 0.0
    %1168 = vmatpush1.msra.mxu0 0.0
    %1169 = vmatprep.subr.mxu0 0.0
    %1170 = vmatpush1.msra.mxu0 0.0
    %1171 = vmatprep.subr.mxu0 0.0
    %1172 = vmatpush1.msra.mxu0 0.0
    %1173 = vmatprep.subr.mxu0 0.0
    %1174 = vmatpush1.msra.mxu0 0.0
    %1175 = vmatprep.subr.mxu0 0.0
    %1176 = vmatpush1.msra.mxu0 0.0
    %1177 = vmatprep.subr.mxu0 0.0
    %1178 = vmatpush1.msra.mxu0 0.0
    %1179 = vmatprep.subr.mxu0 0.0
    %1180 = vmatpush1.msra.mxu0 0.0
    %1181 = vmatprep.subr.mxu0 0.0
    %1182 = vmatpush1.msra.mxu0 0.0
    %1183 = vmatprep.subr.mxu0 0.0
    %1184 = vmatpush1.msra.mxu0 0.0
    %1185 = vmatprep.subr.mxu0 0.0
    %1186 = vmatpush1.msra.mxu0 0.0
    %1187 = vmatprep.subr.mxu0 0.0
    %1188 = vmatpush1.msra.mxu0 0.0
    %1189 = vmatprep.subr.mxu0 0.0
    %1190 = vmatpush1.msra.mxu0 0.0
    %1191 = vmatprep.subr.mxu0 0.0
    %1192 = vmatpush1.msra.mxu0 0.0
    %1193 = vmatprep.subr.mxu0 0.0
    %1194 = vmatpush1.msra.mxu0 0.0
    %1195 = vmatprep.subr.mxu0 0.0
    %1196 = vmatpush1.msra.mxu0 0.0
    %1197 = vmatprep.subr.mxu0 0.0
    %1198 = vmatpush1.msra.mxu0 0.0
    %1199 = vmatprep.subr.mxu0 0.0
    %1200 = vmatpush1.msra.mxu0 0.0
    %1201 = vmatprep.subr.mxu0 0.0
    %1202 = vmatpush1.msra.mxu0 0.0
    %1203 = vmatprep.subr.mxu0 0.0
    %1204 = vmatpush1.msra.mxu0 0.0
    %1205 = vmatprep.subr.mxu0 0.0
    %1206 = vmatpush1.msra.mxu0 0.0
    %1207 = vmatprep.subr.mxu0 0.0
    %1208 = vmatpush1.msra.mxu0 0.0
    %1209 = vmatprep.subr.mxu0 0.0
    %1210 = vmatpush1.msra.mxu0 0.0
    %1211 = vmatprep.mubr.f32.mxu0 0.0
    %1212 = vmatmul.mubr.f32.gmra.mrb[0].mxu0 %v1142
    %v1213 = vpop.f32.mrb[0].mxu0
    %v1214 = vadd.f32 %v1134, %v1213
    %v1215 = vpop.f32.mrb[0].mxu0
    %v1216 = vadd.f32 %v1138, %v1215
    %1217 = vmatprep.mubr.f32.mxu0 0.0
    %1218 = vmatmul.mubr.f32.gmra.mrb[0].mxu0 %v1145
    %v1219 = vpop.f32.mrb[0].mxu0
    %v1220 = vadd.f32 %v1134, %v1219
    %v1221 = vpop.f32.mrb[0].mxu0
    %v1222 = vadd.f32 %v1138, %v1221
    %1223 = vdwg.mxu0
    %s1224 = scalar_lea.vmem [#allocation8], 32
    %1225 = vst [vmem:[%s1224] sm:$0xff] %v1214
    %1226 = vst [vmem:[%s1224 + $0x8] sm:$0xff] %v1216
    %1227 = vst [vmem:[%s1224 + $0x10] sm:$0xff] %v1220
    %1228 = vst [vmem:[%s1224 + $0x18] sm:$0xff] %v1222
    // Predicated region
    $region34: #{tpu_custom_call.1} parent=1 // pred_check
      _
    $region35: #{tpu_custom_call.1} parent=1 // pred_check_branch
      %1230 = sbr.rel (0) target = $region37
    $region36: #{tpu_custom_call.1} parent=1 // pred_region
      %s1232 = ssub.s32 1024, 1024
      %1233 = vsyncadd [#allocation4], %s1232
      %s1234 = sshll.u32 [#allocation8], 4
      %s1235 = int_to_ptr.vmem [resolvable:$true] %s1234
      %1240 = dma.vmem_to_hbm [thread:$0]  %s1235, 1024, %s5, [#allocation4], 256, 256, 16
    $region37: #{tpu_custom_call.1} parent=1 // pred_fallthru
      _
    // Predicated region
    $region38: #{tpu_custom_call.1} parent=1 // pred_check
      _
    $region39: #{tpu_custom_call.1} parent=1 // pred_check_branch
      %1242 = sbr.rel (0) target = $region41
    $region40: #{tpu_custom_call.1} parent=1 // pred_region
      %1243 = dma.done [#allocation4], 1024
    $region41: #{tpu_custom_call.1} parent=1 // pred_fallthru
      _
    %1244 = vsyncpa [#allocation3], 1
    %1245 = vsyncpa [#allocation6], 1
    %1246 = vsyncpa [#allocation4], 1

</llo_original>
